<compile_context>
chip_gen: v7x
topology: tpu7x:2x2x1
jax: 0.10.0
libtpu: 0.0.40
codegen_flags: <defaults>
</compile_context>

<pallas_src>
import math
import jax
import jax.numpy as jnp
from jax.experimental import pallas as pl
from jax.experimental.pallas import tpu as pltpu  # noqa: F401  (TPU backend)

B, S, D = 2, 8, 32     # batch, seq, d_model
H = 4                  # heads
DK = D // H            # head dim
DFF = 64               # feed-forward hidden dim
EPS = 1e-6
LANES = 128            # packed-slab lane width

# Row layout of the packed parameter slab (136, 128):
#   rows   0: 32, lanes  0: 96  -> wqkv  (Wq pre-scaled by 1/sqrt(DK) | Wk | Wv)
#   rows   0: 32, lanes 96:128  -> wo
#   rows  32: 64, lanes  0: 64  -> w1
#   rows  64:128, lanes  0: 32  -> w2
#   rows 128:136                -> bqkv, bo, b1, b2, g1, be1, g2, be2 (one per row)
_BIAS_ROW = 2 * D + DFF          # 128
_SLAB_ROWS = _BIAS_ROW + 8       # 136


def _layernorm(x, gamma, beta):
    # torch LayerNorm in this module: mean over last dim, *unbiased* std, (std + eps)
    mean = jnp.mean(x, axis=-1, keepdims=True)
    var = jnp.sum((x - mean) ** 2, axis=-1, keepdims=True) / (x.shape[-1] - 1)
    std = jnp.sqrt(var)
    return gamma * (x - mean) * pl.reciprocal(std + EPS, approx=False) + beta


def encoder_layer_kernel(x_ref, slab_ref, o_ref):
    x = x_ref[...]                                   # (B*S, D)

    # ----- static slices of the single packed parameter slab (all free) -----
    wqkv = slab_ref[0:D, 0:3 * D]                    # (D, 3D), Q cols pre-scaled
    wo   = slab_ref[0:D, 3 * D:4 * D]                # (D, D)
    w1   = slab_ref[D:2 * D, 0:DFF]                  # (D, DFF)
    w2   = slab_ref[2 * D:2 * D + DFF, 0:D]          # (DFF, D)

    r = _BIAS_ROW
    bqkv = slab_ref[r + 0:r + 1, 0:3 * D]            # (1, 3D), bq pre-scaled
    bo   = slab_ref[r + 1:r + 2, 0:D]
    b1   = slab_ref[r + 2:r + 3, 0:DFF]
    b2   = slab_ref[r + 3:r + 4, 0:D]
    g1   = slab_ref[r + 4:r + 5, 0:D]
    be1  = slab_ref[r + 5:r + 6, 0:D]
    g2   = slab_ref[r + 6:r + 7, 0:D]
    be2  = slab_ref[r + 7:r + 8, 0:D]

    # ---------------- sublayer 0: multi-head self-attention ----------------
    xn = _layernorm(x, g1, be1)
    qkv = jnp.dot(xn, wqkv, preferred_element_type=jnp.float32) + bqkv      # (B*S, 3D)

    # static lane slices; reshape only splits the (sublane-aligned) leading dim
    q = qkv[:, 0:D].reshape(B, S, D)                 # already scaled by 1/sqrt(DK)
    k = qkv[:, D:2 * D].reshape(B, S, D)
    v = qkv[:, 2 * D:3 * D].reshape(B, S, D)

    heads = []
    for h in range(H):                               # static unrolled loop over heads
        qh = q[:, :, h * DK:(h + 1) * DK]            # (B, S, DK)
        kh = k[:, :, h * DK:(h + 1) * DK]
        vh = v[:, :, h * DK:(h + 1) * DK]
        # batched over B, contracts DK directly (no explicit transpose, no * scale)
        s = jnp.einsum('bqd,bkd->bqk', qh, kh,
                       preferred_element_type=jnp.float32)                  # (B, S, S)
        s = s - jnp.max(s, axis=-1, keepdims=True)
        p = jnp.exp(s)
        p = p * pl.reciprocal(jnp.sum(p, axis=-1, keepdims=True), approx=False)
        heads.append(jnp.einsum('bqk,bkd->bqd', p, vh,
                                preferred_element_type=jnp.float32))        # (B, S, DK)
    attn = jnp.concatenate(heads, axis=-1).reshape(B * S, D)                # (B*S, D)
    attn = jnp.dot(attn, wo, preferred_element_type=jnp.float32) + bo
    x1 = x + attn                                    # residual (dropout = identity)

    # ---------------- sublayer 1: position-wise feed-forward ---------------
    xn2 = _layernorm(x1, g2, be2)
    hdn = jnp.dot(xn2, w1, preferred_element_type=jnp.float32) + b1
    hdn = jnp.maximum(hdn, 0.0)
    ff = jnp.dot(hdn, w2, preferred_element_type=jnp.float32) + b2

    o_ref[...] = x1 + ff


def pack_encoder_params(params):
    """One-time packing of all weights/biases/LN params into a single (136, 128)
    lane-dense slab.  Done at parameter-init time, NOT per forward call."""
    (wq, bq, wk, bk, wv, bv, wo, bo, w1, b1, w2, b2, g1, be1, g2, be2) = params

    scale = 1.0 / math.sqrt(DK)
    # Fold 1/sqrt(DK) into the Q projection (weight AND bias) -> scores need no mul.
    wqkv = jnp.concatenate([wq * scale, wk, wv], axis=1)        # (D, 3D)
    bqkv = jnp.concatenate([bq * scale, bk, bv], axis=1)        # (1, 3D)

    def _row(vec):
        return jnp.pad(vec, ((0, 0), (0, LANES - vec.shape[1])))

    top = jnp.concatenate([wqkv, wo], axis=1)                   # (32, 128)
    mid1 = jnp.pad(w1, ((0, 0), (0, LANES - DFF)))              # (32, 128)
    mid2 = jnp.pad(w2, ((0, 0), (0, LANES - D)))                # (64, 128)
    bias_rows = jnp.concatenate(
        [_row(bqkv), _row(bo), _row(b1), _row(b2),
         _row(g1), _row(be1), _row(g2), _row(be2)], axis=0)     # (8, 128)

    slab = jnp.concatenate([top, mid1, mid2, bias_rows], axis=0)  # (136, 128)
    assert slab.shape == (_SLAB_ROWS, LANES)
    return slab


def encoder_layer(x, slab):
    """Forward pass. `slab` is the pre-packed parameter slab from
    pack_encoder_params(); the per-call wrapper does no packing work."""
    x2d = x.reshape(B * S, D)

    # Rough advisory cost so XLA can overlap neighbours with this tiny call.
    cost = pl.CostEstimate(
        flops=2 * (B * S) * (D * 3 * D + D * D + D * DFF + DFF * D)
              + 2 * 2 * B * H * S * S * DK,
        transcendentals=B * H * S * S + 2 * B * S,
        bytes_accessed=4 * (2 * B * S * D + _SLAB_ROWS * LANES),
    )

    # Single un-gridded invocation: every operand fits comfortably in VMEM, so
    # whole-array blocks avoid all per-step pipeline overhead; only 2 DMAs in.
    out = pl.pallas_call(
        encoder_layer_kernel,
        out_shape=jax.ShapeDtypeStruct((B * S, D), jnp.float32),
        cost_estimate=cost,
    )(x2d, slab)

    return out.reshape(B, S, D)


# ------------------------- pure-JAX reference -------------------------
def encoder_layer_ref(x, params):
    (wq, bq, wk, bk, wv, bv, wo, bo, w1, b1, w2, b2, g1, be1, g2, be2) = params

    def ln(y, g, bb):
        mean = jnp.mean(y, axis=-1, keepdims=True)
        var = jnp.sum((y - mean) ** 2, axis=-1, keepdims=True) / (y.shape[-1] - 1)
        return g * (y - mean) / (jnp.sqrt(var) + EPS) + bb

    xn = ln(x, g1, be1)
    q = xn @ wq + bq
    k = xn @ wk + bk
    v = xn @ wv + bv
    qh = q.reshape(B, S, H, DK).transpose(0, 2, 1, 3)
    kh = k.reshape(B, S, H, DK).transpose(0, 2, 1, 3)
    vh = v.reshape(B, S, H, DK).transpose(0, 2, 1, 3)
    sc = jnp.einsum('bhqd,bhkd->bhqk', qh, kh) / math.sqrt(DK)
    p = jax.nn.softmax(sc, axis=-1)
    o = jnp.einsum('bhqk,bhkd->bhqd', p, vh).transpose(0, 2, 1, 3).reshape(B, S, D)
    x1 = x + (o @ wo + bo)

    xn2 = ln(x1, g2, be2)
    ff = jnp.maximum(xn2 @ w1 + b1, 0.0) @ w2 + b2
    return x1 + ff


if __name__ == "__main__":
    key = jax.random.PRNGKey(0)
    ks = jax.random.split(key, 16)

    x = jax.random.normal(ks[0], (B, S, D), dtype=jnp.float32)

    def w(k, shape, scale=0.1):
        return scale * jax.random.normal(k, shape, dtype=jnp.float32)

    params = (
        w(ks[1], (D, D)), w(ks[2], (1, D)),          # Wq, bq
        w(ks[3], (D, D)), w(ks[4], (1, D)),          # Wk, bk
        w(ks[5], (D, D)), w(ks[6], (1, D)),          # Wv, bv
        w(ks[7], (D, D)), w(ks[8], (1, D)),          # Wo, bo
        w(ks[9], (D, DFF)), w(ks[10], (1, DFF)),     # W1, b1
        w(ks[11], (DFF, D)), w(ks[12], (1, D)),      # W2, b2
        jnp.ones((1, D), jnp.float32), jnp.zeros((1, D), jnp.float32),   # LN1 a_2, b_2
        jnp.ones((1, D), jnp.float32), jnp.zeros((1, D), jnp.float32),   # LN2 a_2, b_2
    )

    # One-time parameter packing (init-time, not per-call).
    slab = jax.block_until_ready(pack_encoder_params(params))

    out = jax.block_until_ready(encoder_layer(x, slab))
    ref = jax.block_until_ready(encoder_layer_ref(x, params))

    assert out.shape == (B, S, D)
    assert jnp.allclose(out, ref, atol=1e-4, rtol=1e-4), "mismatch vs reference"
    print("KERNEL_OK")
</pallas_src>

<mosaic_0001>
module attributes {stable_mosaic.version = 11 : i64} {
  func.func @encoder_layer_kernel(%arg0: memref<16x32xf32, #tpu.memory_space<vmem>>, %arg1: memref<136x128xf32, #tpu.memory_space<vmem>>, %arg2: memref<16x32xf32, #tpu.memory_space<vmem>>) attributes {dimension_semantics = [], scalar_prefetch = 0 : i64, scratch_operands = 0 : i64, tpu.core_type = #tpu.core_type<tc>} {
    %c0 = arith.constant 0 : index
    %c0_0 = arith.constant 0 : index
    %0 = vector.load %arg0[%c0, %c0_0] : memref<16x32xf32, #tpu.memory_space<vmem>>, vector<16x32xf32>
    %c0_1 = arith.constant 0 : index
    %c0_2 = arith.constant 0 : index
    %1 = vector.load %arg1[%c0_1, %c0_2] : memref<136x128xf32, #tpu.memory_space<vmem>>, vector<32x96xf32>
    %c0_3 = arith.constant 0 : index
    %c96 = arith.constant 96 : index
    %2 = vector.load %arg1[%c0_3, %c96] : memref<136x128xf32, #tpu.memory_space<vmem>>, vector<32x32xf32>
    %c32 = arith.constant 32 : index
    %c0_4 = arith.constant 0 : index
    %3 = vector.load %arg1[%c32, %c0_4] : memref<136x128xf32, #tpu.memory_space<vmem>>, vector<32x64xf32>
    %c64 = arith.constant 64 : index
    %c0_5 = arith.constant 0 : index
    %4 = vector.load %arg1[%c64, %c0_5] : memref<136x128xf32, #tpu.memory_space<vmem>>, vector<64x32xf32>
    %c128 = arith.constant 128 : index
    %c0_6 = arith.constant 0 : index
    %5 = vector.load %arg1[%c128, %c0_6] : memref<136x128xf32, #tpu.memory_space<vmem>>, vector<1x96xf32>
    %c129 = arith.constant 129 : index
    %c0_7 = arith.constant 0 : index
    %6 = vector.load %arg1[%c129, %c0_7] : memref<136x128xf32, #tpu.memory_space<vmem>>, vector<1x32xf32>
    %c130 = arith.constant 130 : index
    %c0_8 = arith.constant 0 : index
    %7 = vector.load %arg1[%c130, %c0_8] : memref<136x128xf32, #tpu.memory_space<vmem>>, vector<1x64xf32>
    %c131 = arith.constant 131 : index
    %c0_9 = arith.constant 0 : index
    %8 = vector.load %arg1[%c131, %c0_9] : memref<136x128xf32, #tpu.memory_space<vmem>>, vector<1x32xf32>
    %c132 = arith.constant 132 : index
    %c0_10 = arith.constant 0 : index
    %9 = vector.load %arg1[%c132, %c0_10] : memref<136x128xf32, #tpu.memory_space<vmem>>, vector<1x32xf32>
    %c133 = arith.constant 133 : index
    %c0_11 = arith.constant 0 : index
    %10 = vector.load %arg1[%c133, %c0_11] : memref<136x128xf32, #tpu.memory_space<vmem>>, vector<1x32xf32>
    %c134 = arith.constant 134 : index
    %c0_12 = arith.constant 0 : index
    %11 = vector.load %arg1[%c134, %c0_12] : memref<136x128xf32, #tpu.memory_space<vmem>>, vector<1x32xf32>
    %c135 = arith.constant 135 : index
    %c0_13 = arith.constant 0 : index
    %12 = vector.load %arg1[%c135, %c0_13] : memref<136x128xf32, #tpu.memory_space<vmem>>, vector<1x32xf32>
    %cst = arith.constant dense<0.000000e+00> : vector<16xf32>
    %13 = vector.multi_reduction <add>, %0, %cst [1] : vector<16x32xf32> to vector<16xf32>
    %14 = vector.shape_cast %13 : vector<16xf32> to vector<16x1xf32>
    %cst_14 = arith.constant 3.200000e+01 : f32
    %15 = vector.broadcast %cst_14 : f32 to vector<16x1xf32>
    %16 = arith.divf %14, %15 : vector<16x1xf32>
    %17 = vector.broadcast %16 : vector<16x1xf32> to vector<16x32xf32>
    %18 = arith.subf %0, %17 : vector<16x32xf32>
    %19 = arith.mulf %18, %18 : vector<16x32xf32>
    %cst_15 = arith.constant dense<0.000000e+00> : vector<16xf32>
    %20 = vector.multi_reduction <add>, %19, %cst_15 [1] : vector<16x32xf32> to vector<16xf32>
    %21 = vector.shape_cast %20 : vector<16xf32> to vector<16x1xf32>
    %cst_16 = arith.constant 3.100000e+01 : f32
    %22 = vector.broadcast %cst_16 : f32 to vector<16x1xf32>
    %23 = arith.divf %21, %22 : vector<16x1xf32>
    %24 = math.sqrt %23 : vector<16x1xf32>
    %25 = vector.broadcast %16 : vector<16x1xf32> to vector<16x32xf32>
    %26 = arith.subf %0, %25 : vector<16x32xf32>
    %27 = vector.broadcast %9 : vector<1x32xf32> to vector<16x32xf32>
    %28 = arith.mulf %27, %26 : vector<16x32xf32>
    %cst_17 = arith.constant 9.99999997E-7 : f32
    %29 = vector.broadcast %cst_17 : f32 to vector<16x1xf32>
    %30 = arith.addf %24, %29 : vector<16x1xf32>
    %31 = tpu.reciprocal %30 : vector<16x1xf32> -> vector<16x1xf32>
    %32 = vector.broadcast %31 : vector<16x1xf32> to vector<16x32xf32>
    %33 = arith.mulf %28, %32 : vector<16x32xf32>
    %34 = vector.broadcast %10 : vector<1x32xf32> to vector<16x32xf32>
    %35 = arith.addf %33, %34 : vector<16x32xf32>
    %cst_18 = arith.constant dense<0.000000e+00> : vector<16x96xf32>
    %36 = tpu.matmul %35, %1, %cst_18 {dimension_numbers = #tpu.dot_dimension_numbers<[1], [0], [0], [1], [0, 0, 1, 1], [], []>} : vector<16x32xf32>, vector<32x96xf32>, vector<16x96xf32> -> vector<16x96xf32>
    %37 = vector.broadcast %5 : vector<1x96xf32> to vector<16x96xf32>
    %38 = arith.addf %36, %37 : vector<16x96xf32>
    %39 = vector.extract_strided_slice %38 {offsets = [0, 0], sizes = [16, 32], strides = [1, 1]} : vector<16x96xf32> to vector<16x32xf32>
    %40 = vector.shape_cast %39 : vector<16x32xf32> to vector<2x8x32xf32>
    %41 = vector.extract_strided_slice %38 {offsets = [0, 32], sizes = [16, 32], strides = [1, 1]} : vector<16x96xf32> to vector<16x32xf32>
    %42 = vector.shape_cast %41 : vector<16x32xf32> to vector<2x8x32xf32>
    %43 = vector.extract_strided_slice %38 {offsets = [0, 64], sizes = [16, 32], strides = [1, 1]} : vector<16x96xf32> to vector<16x32xf32>
    %44 = vector.shape_cast %43 : vector<16x32xf32> to vector<2x8x32xf32>
    %45 = vector.extract_strided_slice %40 {offsets = [0, 0, 0], sizes = [2, 8, 8], strides = [1, 1, 1]} : vector<2x8x32xf32> to vector<2x8x8xf32>
    %46 = vector.extract_strided_slice %42 {offsets = [0, 0, 0], sizes = [2, 8, 8], strides = [1, 1, 1]} : vector<2x8x32xf32> to vector<2x8x8xf32>
    %47 = vector.extract_strided_slice %44 {offsets = [0, 0, 0], sizes = [2, 8, 8], strides = [1, 1, 1]} : vector<2x8x32xf32> to vector<2x8x8xf32>
    "tpu.trace_start"() <{level = 10 : i32, message = "bqd,bkd->bqk"}> : () -> ()
    %cst_19 = arith.constant dense<0.000000e+00> : vector<2x8x8xf32>
    %48 = tpu.matmul %45, %46, %cst_19 {dimension_numbers = #tpu.dot_dimension_numbers<[2], [2], [1], [1], [0, 0, 0, 1, 1, 1], [0], [0]>} : vector<2x8x8xf32>, vector<2x8x8xf32>, vector<2x8x8xf32> -> vector<2x8x8xf32>
    "tpu.trace_stop"() : () -> ()
    %cst_20 = arith.constant dense<0xFF800000> : vector<2x8xf32>
    %49 = vector.multi_reduction <maximumf>, %48, %cst_20 [2] : vector<2x8x8xf32> to vector<2x8xf32>
    %50 = vector.shape_cast %49 : vector<2x8xf32> to vector<2x8x1xf32>
    %51 = vector.broadcast %50 : vector<2x8x1xf32> to vector<2x8x8xf32>
    %52 = arith.subf %48, %51 : vector<2x8x8xf32>
    %53 = math.exp %52 : vector<2x8x8xf32>
    %cst_21 = arith.constant dense<0.000000e+00> : vector<2x8xf32>
    %54 = vector.multi_reduction <add>, %53, %cst_21 [2] : vector<2x8x8xf32> to vector<2x8xf32>
    %55 = vector.shape_cast %54 : vector<2x8xf32> to vector<2x8x1xf32>
    %56 = tpu.reciprocal %55 : vector<2x8x1xf32> -> vector<2x8x1xf32>
    %57 = vector.broadcast %56 : vector<2x8x1xf32> to vector<2x8x8xf32>
    %58 = arith.mulf %53, %57 : vector<2x8x8xf32>
    "tpu.trace_start"() <{level = 10 : i32, message = "bqk,bkd->bqd"}> : () -> ()
    %cst_22 = arith.constant dense<0.000000e+00> : vector<2x8x8xf32>
    %59 = tpu.matmul %58, %47, %cst_22 {dimension_numbers = #tpu.dot_dimension_numbers<[2], [1], [1], [2], [0, 0, 0, 1, 1, 2], [0], [0]>} : vector<2x8x8xf32>, vector<2x8x8xf32>, vector<2x8x8xf32> -> vector<2x8x8xf32>
    "tpu.trace_stop"() : () -> ()
    %60 = vector.extract_strided_slice %40 {offsets = [0, 0, 8], sizes = [2, 8, 8], strides = [1, 1, 1]} : vector<2x8x32xf32> to vector<2x8x8xf32>
    %61 = vector.extract_strided_slice %42 {offsets = [0, 0, 8], sizes = [2, 8, 8], strides = [1, 1, 1]} : vector<2x8x32xf32> to vector<2x8x8xf32>
    %62 = vector.extract_strided_slice %44 {offsets = [0, 0, 8], sizes = [2, 8, 8], strides = [1, 1, 1]} : vector<2x8x32xf32> to vector<2x8x8xf32>
    "tpu.trace_start"() <{level = 10 : i32, message = "bqd,bkd->bqk"}> : () -> ()
    %cst_23 = arith.constant dense<0.000000e+00> : vector<2x8x8xf32>
    %63 = tpu.matmul %60, %61, %cst_23 {dimension_numbers = #tpu.dot_dimension_numbers<[2], [2], [1], [1], [0, 0, 0, 1, 1, 1], [0], [0]>} : vector<2x8x8xf32>, vector<2x8x8xf32>, vector<2x8x8xf32> -> vector<2x8x8xf32>
    "tpu.trace_stop"() : () -> ()
    %cst_24 = arith.constant dense<0xFF800000> : vector<2x8xf32>
    %64 = vector.multi_reduction <maximumf>, %63, %cst_24 [2] : vector<2x8x8xf32> to vector<2x8xf32>
    %65 = vector.shape_cast %64 : vector<2x8xf32> to vector<2x8x1xf32>
    %66 = vector.broadcast %65 : vector<2x8x1xf32> to vector<2x8x8xf32>
    %67 = arith.subf %63, %66 : vector<2x8x8xf32>
    %68 = math.exp %67 : vector<2x8x8xf32>
    %cst_25 = arith.constant dense<0.000000e+00> : vector<2x8xf32>
    %69 = vector.multi_reduction <add>, %68, %cst_25 [2] : vector<2x8x8xf32> to vector<2x8xf32>
    %70 = vector.shape_cast %69 : vector<2x8xf32> to vector<2x8x1xf32>
    %71 = tpu.reciprocal %70 : vector<2x8x1xf32> -> vector<2x8x1xf32>
    %72 = vector.broadcast %71 : vector<2x8x1xf32> to vector<2x8x8xf32>
    %73 = arith.mulf %68, %72 : vector<2x8x8xf32>
    "tpu.trace_start"() <{level = 10 : i32, message = "bqk,bkd->bqd"}> : () -> ()
    %cst_26 = arith.constant dense<0.000000e+00> : vector<2x8x8xf32>
    %74 = tpu.matmul %73, %62, %cst_26 {dimension_numbers = #tpu.dot_dimension_numbers<[2], [1], [1], [2], [0, 0, 0, 1, 1, 2], [0], [0]>} : vector<2x8x8xf32>, vector<2x8x8xf32>, vector<2x8x8xf32> -> vector<2x8x8xf32>
    "tpu.trace_stop"() : () -> ()
    %75 = vector.extract_strided_slice %40 {offsets = [0, 0, 16], sizes = [2, 8, 8], strides = [1, 1, 1]} : vector<2x8x32xf32> to vector<2x8x8xf32>
    %76 = vector.extract_strided_slice %42 {offsets = [0, 0, 16], sizes = [2, 8, 8], strides = [1, 1, 1]} : vector<2x8x32xf32> to vector<2x8x8xf32>
    %77 = vector.extract_strided_slice %44 {offsets = [0, 0, 16], sizes = [2, 8, 8], strides = [1, 1, 1]} : vector<2x8x32xf32> to vector<2x8x8xf32>
    "tpu.trace_start"() <{level = 10 : i32, message = "bqd,bkd->bqk"}> : () -> ()
    %cst_27 = arith.constant dense<0.000000e+00> : vector<2x8x8xf32>
    %78 = tpu.matmul %75, %76, %cst_27 {dimension_numbers = #tpu.dot_dimension_numbers<[2], [2], [1], [1], [0, 0, 0, 1, 1, 1], [0], [0]>} : vector<2x8x8xf32>, vector<2x8x8xf32>, vector<2x8x8xf32> -> vector<2x8x8xf32>
    "tpu.trace_stop"() : () -> ()
    %cst_28 = arith.constant dense<0xFF800000> : vector<2x8xf32>
    %79 = vector.multi_reduction <maximumf>, %78, %cst_28 [2] : vector<2x8x8xf32> to vector<2x8xf32>
    %80 = vector.shape_cast %79 : vector<2x8xf32> to vector<2x8x1xf32>
    %81 = vector.broadcast %80 : vector<2x8x1xf32> to vector<2x8x8xf32>
    %82 = arith.subf %78, %81 : vector<2x8x8xf32>
    %83 = math.exp %82 : vector<2x8x8xf32>
    %cst_29 = arith.constant dense<0.000000e+00> : vector<2x8xf32>
    %84 = vector.multi_reduction <add>, %83, %cst_29 [2] : vector<2x8x8xf32> to vector<2x8xf32>
    %85 = vector.shape_cast %84 : vector<2x8xf32> to vector<2x8x1xf32>
    %86 = tpu.reciprocal %85 : vector<2x8x1xf32> -> vector<2x8x1xf32>
    %87 = vector.broadcast %86 : vector<2x8x1xf32> to vector<2x8x8xf32>
    %88 = arith.mulf %83, %87 : vector<2x8x8xf32>
    "tpu.trace_start"() <{level = 10 : i32, message = "bqk,bkd->bqd"}> : () -> ()
    %cst_30 = arith.constant dense<0.000000e+00> : vector<2x8x8xf32>
    %89 = tpu.matmul %88, %77, %cst_30 {dimension_numbers = #tpu.dot_dimension_numbers<[2], [1], [1], [2], [0, 0, 0, 1, 1, 2], [0], [0]>} : vector<2x8x8xf32>, vector<2x8x8xf32>, vector<2x8x8xf32> -> vector<2x8x8xf32>
    "tpu.trace_stop"() : () -> ()
    %90 = vector.extract_strided_slice %40 {offsets = [0, 0, 24], sizes = [2, 8, 8], strides = [1, 1, 1]} : vector<2x8x32xf32> to vector<2x8x8xf32>
    %91 = vector.extract_strided_slice %42 {offsets = [0, 0, 24], sizes = [2, 8, 8], strides = [1, 1, 1]} : vector<2x8x32xf32> to vector<2x8x8xf32>
    %92 = vector.extract_strided_slice %44 {offsets = [0, 0, 24], sizes = [2, 8, 8], strides = [1, 1, 1]} : vector<2x8x32xf32> to vector<2x8x8xf32>
    "tpu.trace_start"() <{level = 10 : i32, message = "bqd,bkd->bqk"}> : () -> ()
    %cst_31 = arith.constant dense<0.000000e+00> : vector<2x8x8xf32>
    %93 = tpu.matmul %90, %91, %cst_31 {dimension_numbers = #tpu.dot_dimension_numbers<[2], [2], [1], [1], [0, 0, 0, 1, 1, 1], [0], [0]>} : vector<2x8x8xf32>, vector<2x8x8xf32>, vector<2x8x8xf32> -> vector<2x8x8xf32>
    "tpu.trace_stop"() : () -> ()
    %cst_32 = arith.constant dense<0xFF800000> : vector<2x8xf32>
    %94 = vector.multi_reduction <maximumf>, %93, %cst_32 [2] : vector<2x8x8xf32> to vector<2x8xf32>
    %95 = vector.shape_cast %94 : vector<2x8xf32> to vector<2x8x1xf32>
    %96 = vector.broadcast %95 : vector<2x8x1xf32> to vector<2x8x8xf32>
    %97 = arith.subf %93, %96 : vector<2x8x8xf32>
    %98 = math.exp %97 : vector<2x8x8xf32>
    %cst_33 = arith.constant dense<0.000000e+00> : vector<2x8xf32>
    %99 = vector.multi_reduction <add>, %98, %cst_33 [2] : vector<2x8x8xf32> to vector<2x8xf32>
    %100 = vector.shape_cast %99 : vector<2x8xf32> to vector<2x8x1xf32>
    %101 = tpu.reciprocal %100 : vector<2x8x1xf32> -> vector<2x8x1xf32>
    %102 = vector.broadcast %101 : vector<2x8x1xf32> to vector<2x8x8xf32>
    %103 = arith.mulf %98, %102 : vector<2x8x8xf32>
    "tpu.trace_start"() <{level = 10 : i32, message = "bqk,bkd->bqd"}> : () -> ()
    %cst_34 = arith.constant dense<0.000000e+00> : vector<2x8x8xf32>
    %104 = tpu.matmul %103, %92, %cst_34 {dimension_numbers = #tpu.dot_dimension_numbers<[2], [1], [1], [2], [0, 0, 0, 1, 1, 2], [0], [0]>} : vector<2x8x8xf32>, vector<2x8x8xf32>, vector<2x8x8xf32> -> vector<2x8x8xf32>
    "tpu.trace_stop"() : () -> ()
    %105 = tpu.concatenate %59, %74, %89, %104 in 2 : vector<2x8x8xf32>, vector<2x8x8xf32>, vector<2x8x8xf32>, vector<2x8x8xf32> -> vector<2x8x32xf32>
    %106 = vector.shape_cast %105 : vector<2x8x32xf32> to vector<16x32xf32>
    %cst_35 = arith.constant dense<0.000000e+00> : vector<16x32xf32>
    %107 = tpu.matmul %106, %2, %cst_35 {dimension_numbers = #tpu.dot_dimension_numbers<[1], [0], [0], [1], [0, 0, 1, 1], [], []>} : vector<16x32xf32>, vector<32x32xf32>, vector<16x32xf32> -> vector<16x32xf32>
    %108 = vector.broadcast %6 : vector<1x32xf32> to vector<16x32xf32>
    %109 = arith.addf %107, %108 : vector<16x32xf32>
    %110 = arith.addf %0, %109 : vector<16x32xf32>
    %cst_36 = arith.constant dense<0.000000e+00> : vector<16xf32>
    %111 = vector.multi_reduction <add>, %110, %cst_36 [1] : vector<16x32xf32> to vector<16xf32>
    %112 = vector.shape_cast %111 : vector<16xf32> to vector<16x1xf32>
    %cst_37 = arith.constant 3.200000e+01 : f32
    %113 = vector.broadcast %cst_37 : f32 to vector<16x1xf32>
    %114 = arith.divf %112, %113 : vector<16x1xf32>
    %115 = vector.broadcast %114 : vector<16x1xf32> to vector<16x32xf32>
    %116 = arith.subf %110, %115 : vector<16x32xf32>
    %117 = arith.mulf %116, %116 : vector<16x32xf32>
    %cst_38 = arith.constant dense<0.000000e+00> : vector<16xf32>
    %118 = vector.multi_reduction <add>, %117, %cst_38 [1] : vector<16x32xf32> to vector<16xf32>
    %119 = vector.shape_cast %118 : vector<16xf32> to vector<16x1xf32>
    %cst_39 = arith.constant 3.100000e+01 : f32
    %120 = vector.broadcast %cst_39 : f32 to vector<16x1xf32>
    %121 = arith.divf %119, %120 : vector<16x1xf32>
    %122 = math.sqrt %121 : vector<16x1xf32>
    %123 = vector.broadcast %114 : vector<16x1xf32> to vector<16x32xf32>
    %124 = arith.subf %110, %123 : vector<16x32xf32>
    %125 = vector.broadcast %11 : vector<1x32xf32> to vector<16x32xf32>
    %126 = arith.mulf %125, %124 : vector<16x32xf32>
    %cst_40 = arith.constant 9.99999997E-7 : f32
    %127 = vector.broadcast %cst_40 : f32 to vector<16x1xf32>
    %128 = arith.addf %122, %127 : vector<16x1xf32>
    %129 = tpu.reciprocal %128 : vector<16x1xf32> -> vector<16x1xf32>
    %130 = vector.broadcast %129 : vector<16x1xf32> to vector<16x32xf32>
    %131 = arith.mulf %126, %130 : vector<16x32xf32>
    %132 = vector.broadcast %12 : vector<1x32xf32> to vector<16x32xf32>
    %133 = arith.addf %131, %132 : vector<16x32xf32>
    %cst_41 = arith.constant dense<0.000000e+00> : vector<16x64xf32>
    %134 = tpu.matmul %133, %3, %cst_41 {dimension_numbers = #tpu.dot_dimension_numbers<[1], [0], [0], [1], [0, 0, 1, 1], [], []>} : vector<16x32xf32>, vector<32x64xf32>, vector<16x64xf32> -> vector<16x64xf32>
    %135 = vector.broadcast %7 : vector<1x64xf32> to vector<16x64xf32>
    %136 = arith.addf %134, %135 : vector<16x64xf32>
    %cst_42 = arith.constant 0.000000e+00 : f32
    %137 = vector.broadcast %cst_42 : f32 to vector<16x64xf32>
    %138 = arith.maximumf %136, %137 : vector<16x64xf32>
    %cst_43 = arith.constant dense<0.000000e+00> : vector<16x32xf32>
    %139 = tpu.matmul %138, %4, %cst_43 {dimension_numbers = #tpu.dot_dimension_numbers<[1], [0], [0], [1], [0, 0, 1, 1], [], []>} : vector<16x64xf32>, vector<64x32xf32>, vector<16x32xf32> -> vector<16x32xf32>
    %140 = vector.broadcast %8 : vector<1x32xf32> to vector<16x32xf32>
    %141 = arith.addf %139, %140 : vector<16x32xf32>
    %142 = arith.addf %110, %141 : vector<16x32xf32>
    %c0_44 = arith.constant 0 : index
    %c0_45 = arith.constant 0 : index
    %143 = vector.load %arg2[%c0_44, %c0_45] : memref<16x32xf32, #tpu.memory_space<vmem>>, vector<16x32xf32>
    tpu.vector_store %arg2[%c0_44, %c0_45], %142 {strides = array<i32>} : memref<16x32xf32, #tpu.memory_space<vmem>>, vector<16x32xf32>,
    return
  }
}

</mosaic_0001>

<llo_original>
// kernel: tpu_custom_call.1
$region0: #{tpu_custom_call.1}
  #allocation0 [shape = 'u32[]', space=smem, size = 0x4, offset = 0x4, fixed_abs, tag = 'smem constant byte address 0x4 - core index']
  #allocation1 [shape = 'u32[144,128]{1,0:T(1,128)}', space=vmem, size = 0x12000, scoped, tag = 'internal scratch']
  %s0 = inlined_call_operand.hbm [shape: f32[16,32], index: 0, kind: input, shape index: {}]
  %s1 = inlined_call_operand.hbm [shape: f32[136,128], index: 1, kind: input, shape index: {}]
  %s2 = inlined_call_operand.hbm [shape: f32[16,32], index: 2, kind: output, shape index: {}]
  %s3 = sld [smem:[#allocation0]]
  $region26: #{tpu_custom_call.1} parent=0
    _
  %s5 = ssub.s32 1, %s3
  %s6 = scalar_select 0, %s5, %s3
  $region1: #{tpu_custom_call.1} parent=0
    #allocation2 [shape = 'u8[8192]{0}', space=vmem, size = 0x2000, scoped, tag = 'input window, operand 0, single buffered']
    #allocation3 [shape = 's32[1]{0}', space=sflag, size = 0x4, scoped, tag = 'scoped memory for tpu_custom_call.1']
    #allocation4 [shape = 's32[1]{0}', space=sflag, size = 0x4, scoped, tag = 'scoped memory for tpu_custom_call.1']
    #allocation5 [shape = 'u8[69632]{0}', space=vmem, size = 0x11000, scoped, tag = 'input window, operand 1, single buffered']
    #allocation6 [shape = 's32[1]{0}', space=sflag, size = 0x4, scoped, tag = 'scoped memory for tpu_custom_call.1']
    #allocation7 [shape = 'u8[8192]{0}', space=vmem, size = 0x2000, scoped, tag = 'output window, operand 0, single buffered']
    %7 = vsyncpa [#allocation3], 0
    %8 = vsyncpa [#allocation6], 0
    %9 = vsyncpa [#allocation4], 0
    // Predicated region
    $region2: #{tpu_custom_call.1} parent=1 // pred_check
      _
    $region3: #{tpu_custom_call.1} parent=1 // pred_check_branch
      %11 = sbr.rel (0) target = $region5
    $region4: #{tpu_custom_call.1} parent=1 // pred_region
      %s13 = ssub.s32 256, 256
      %14 = vsyncadd [#allocation3], %s13
      %s15 = sshll.u32 [#allocation2], 4
      %s16 = int_to_ptr.vmem [resolvable:$true] %s15
      %21 = dma.hbm_to_vmem [thread:$0]  %s0, 256, %s16, [#allocation3], 128, 128, 8
    $region5: #{tpu_custom_call.1} parent=1 // pred_fallthru
      _
    // Predicated region
    $region6: #{tpu_custom_call.1} parent=1 // pred_check
      _
    $region7: #{tpu_custom_call.1} parent=1 // pred_check_branch
      %23 = sbr.rel (0) target = $region9
    $region8: #{tpu_custom_call.1} parent=1 // pred_region
      %s25 = ssub.s32 2176, 2176
      %26 = vsyncadd [#allocation6], %s25
      %s27 = sshll.u32 [#allocation5], 4
      %s28 = int_to_ptr.vmem [resolvable:$true] %s27
      %33 = dma.hbm_to_vmem [thread:$0]  %s1, 2176, %s28, [#allocation6], 128, 128, 8
    $region9: #{tpu_custom_call.1} parent=1 // pred_fallthru
      _
    // Predicated region
    $region10: #{tpu_custom_call.1} parent=1 // pred_check
      _
    $region11: #{tpu_custom_call.1} parent=1 // pred_check_branch
      %35 = sbr.rel (0) target = $region13
    $region12: #{tpu_custom_call.1} parent=1 // pred_region
      %36 = dma.done [#allocation3], 256
    $region13: #{tpu_custom_call.1} parent=1 // pred_fallthru
      _
    // Predicated region
    $region14: #{tpu_custom_call.1} parent=1 // pred_check
      _
    $region15: #{tpu_custom_call.1} parent=1 // pred_check_branch
      %38 = sbr.rel (0) target = $region17
    $region16: #{tpu_custom_call.1} parent=1 // pred_region
      %39 = dma.done [#allocation6], 2176
    $region17: #{tpu_custom_call.1} parent=1 // pred_fallthru
      _
    %v40 = vld [vmem:[#allocation2] sm:$0xff]
    %v41 = vld [vmem:[#allocation2 + $0x8] sm:$0xff]
    %v42 = vld [vmem:[#allocation5] sm:$0xff]
    %v43 = vld [vmem:[#allocation5 + $0x8] sm:$0xff]
    %v44 = vld [vmem:[#allocation5 + $0x10] sm:$0xff]
    %v45 = vld [vmem:[#allocation5 + $0x18] sm:$0xff]
    %v46 = vld [vmem:[#allocation5 + $0x20] sm:$0xff]
    %v47 = vld [vmem:[#allocation5 + $0x28] sm:$0xff]
    %v48 = vld [vmem:[#allocation5 + $0x30] sm:$0xff]
    %v49 = vld [vmem:[#allocation5 + $0x38] sm:$0xff]
    %v50 = vld [vmem:[#allocation5 + $0x40] sm:$0xff]
    %v51 = vld [vmem:[#allocation5 + $0x48] sm:$0xff]
    %v52 = vld [vmem:[#allocation5 + $0x50] sm:$0xff]
    %v53 = vld [vmem:[#allocation5 + $0x58] sm:$0xff]
    %v54 = vld [vmem:[#allocation5 + $0x60] sm:$0xff]
    %v55 = vld [vmem:[#allocation5 + $0x68] sm:$0xff]
    %v56 = vld [vmem:[#allocation5 + $0x70] sm:$0xff]
    %v57 = vld [vmem:[#allocation5 + $0x78] sm:$0xff]
    %v58 = vld [vmem:[#allocation5 + $0x80] sm:$0x1]
    %v59 = vld [vmem:[#allocation5 + $0x81] sm:$0x1]
    %v60 = vld [vmem:[#allocation5 + $0x82] sm:$0x1]
    %v61 = vld [vmem:[#allocation5 + $0x83] sm:$0x1]
    %v62 = vld [vmem:[#allocation5 + $0x84] sm:$0x1]
    %v63 = vld [vmem:[#allocation5 + $0x85] sm:$0x1]
    %v64 = vld [vmem:[#allocation5 + $0x86] sm:$0x1]
    %v65 = vld [vmem:[#allocation5 + $0x87] sm:$0x1]
    %vm66 = vcmask 261120
    %v67 = vsel %vm66, %v40, 0.0
    %68 = vadd.xlane.f32.xlu0 %v67
    %v69 = vpop.xlane.xlu0 %68
    %v70 = vsel %vm66, %v41, 0.0
    %71 = vadd.xlane.f32.xlu0 %v70
    %v72 = vpop.xlane.xlu0 %71
    %v73 = vrcp.pop 32.0
    %v74 = vmul.f32 %v69, %v73
    %v75 = vmul.f32 %v72, %v73
    %v76 = vsub.f32 %v40, %v74
    %v77 = vsub.f32 %v41, %v75
    %v78 = vmul.f32 %v76, %v76
    %v79 = vmul.f32 %v77, %v77
    %v80 = vsel %vm66, %v78, 0.0
    %81 = vadd.xlane.f32.xlu0 %v80
    %v82 = vpop.xlane.xlu0 %81
    %v83 = vsel %vm66, %v79, 0.0
    %84 = vadd.xlane.f32.xlu0 %v83
    %v85 = vpop.xlane.xlu0 %84
    %v86 = vrcp.pop 31.0
    %v87 = vmul.f32 %v82, %v86
    %v88 = vmul.f32 %v85, %v86
    %v89 = vrsqrt.pop %v87
    %v90 = vmul.f32 %v87, %v89
    %vm91 = vcmp.eq.f32.partialorder %v87, inf
    %v92 = vsel %vm91, %v87, %v90
    %vm93 = vcmp.eq.f32.partialorder %v87, 0.0
    %v94 = vand.u32 %v87, 2147483648
    %v95 = vsel %vm93, %v94, %v92
    %v96 = vrsqrt.pop %v88
    %v97 = vmul.f32 %v88, %v96
    %vm98 = vcmp.eq.f32.partialorder %v88, inf
    %v99 = vsel %vm98, %v88, %v97
    %vm100 = vcmp.eq.f32.partialorder %v88, 0.0
    %v101 = vand.u32 %v88, 2147483648
    %v102 = vsel %vm100, %v101, %v99
    %v103 = vlaneseq
    %v104 = vshrl.u32 %v103, 7
    %v105 = vsub.s32 0, %v104
    %v106 = vrot.slane %v62, %v105
    %v107 = vmul.f32 %v106, %v76
    %v108 = vmul.f32 %v106, %v77
    %v109 = vadd.f32 %v95, 1e-06
    %v110 = vadd.f32 %v102, 1e-06
    %v111 = vrcp.pop %v109
    %v112 = vrcp.pop %v110
    %v113 = vmul.f32 %v107, %v111
    %v114 = vmul.f32 %v108, %v112
    %v115 = vlaneseq
    %v116 = vshrl.u32 %v115, 7
    %v117 = vsub.s32 0, %v116
    %v118 = vrot.slane %v63, %v117
    %v119 = vadd.f32 %v113, %v118
    %v120 = vadd.f32 %v114, %v118
    %v121 = vlaneseq
    %v122 = vshrl.u32 %v121, 7
    %v123 = vsub.s32 0, %v122
    %v124 = vrot.slane %v58, %v123
    %v126 = vsel %vm66, %v119, 0
    %v129 = vsel %vm66, %v120, 0
    %131 = vmatprep.subr.mxu0 0.0
    %132 = vmatpush1.msra.mxu0 %v42
    %133 = vmatprep.subr.mxu0 0.0
    %134 = vmatpush1.msra.mxu0 %v43
    %135 = vmatprep.subr.mxu0 0.0
    %136 = vmatpush1.msra.mxu0 %v44
    %137 = vmatprep.subr.mxu0 0.0
    %138 = vmatpush1.msra.mxu0 %v45
    %139 = vmatprep.subr.mxu0 0.0
    %140 = vmatpush1.msra.mxu0 0.0
    %141 = vmatprep.subr.mxu0 0.0
    %142 = vmatpush1.msra.mxu0 0.0
    %143 = vmatprep.subr.mxu0 0.0
    %144 = vmatpush1.msra.mxu0 0.0
    %145 = vmatprep.subr.mxu0 0.0
    %146 = vmatpush1.msra.mxu0 0.0
    %147 = vmatprep.subr.mxu0 0.0
    %148 = vmatpush1.msra.mxu0 0.0
    %149 = vmatprep.subr.mxu0 0.0
    %150 = vmatpush1.msra.mxu0 0.0
    %151 = vmatprep.subr.mxu0 0.0
    %152 = vmatpush1.msra.mxu0 0.0
    %153 = vmatprep.subr.mxu0 0.0
    %154 = vmatpush1.msra.mxu0 0.0
    %155 = vmatprep.subr.mxu0 0.0
    %156 = vmatpush1.msra.mxu0 0.0
    %157 = vmatprep.subr.mxu0 0.0
    %158 = vmatpush1.msra.mxu0 0.0
    %159 = vmatprep.subr.mxu0 0.0
    %160 = vmatpush1.msra.mxu0 0.0
    %161 = vmatprep.subr.mxu0 0.0
    %162 = vmatpush1.msra.mxu0 0.0
    %163 = vmatprep.subr.mxu0 0.0
    %164 = vmatpush1.msra.mxu0 0.0
    %165 = vmatprep.subr.mxu0 0.0
    %166 = vmatpush1.msra.mxu0 0.0
    %167 = vmatprep.subr.mxu0 0.0
    %168 = vmatpush1.msra.mxu0 0.0
    %169 = vmatprep.subr.mxu0 0.0
    %170 = vmatpush1.msra.mxu0 0.0
    %171 = vmatprep.subr.mxu0 0.0
    %172 = vmatpush1.msra.mxu0 0.0
    %173 = vmatprep.subr.mxu0 0.0
    %174 = vmatpush1.msra.mxu0 0.0
    %175 = vmatprep.subr.mxu0 0.0
    %176 = vmatpush1.msra.mxu0 0.0
    %177 = vmatprep.subr.mxu0 0.0
    %178 = vmatpush1.msra.mxu0 0.0
    %179 = vmatprep.subr.mxu0 0.0
    %180 = vmatpush1.msra.mxu0 0.0
    %181 = vmatprep.subr.mxu0 0.0
    %182 = vmatpush1.msra.mxu0 0.0
    %183 = vmatprep.subr.mxu0 0.0
    %184 = vmatpush1.msra.mxu0 0.0
    %185 = vmatprep.subr.mxu0 0.0
    %186 = vmatpush1.msra.mxu0 0.0
    %187 = vmatprep.subr.mxu0 0.0
    %188 = vmatpush1.msra.mxu0 0.0
    %189 = vmatprep.subr.mxu0 0.0
    %190 = vmatpush1.msra.mxu0 0.0
    %191 = vmatprep.subr.mxu0 0.0
    %192 = vmatpush1.msra.mxu0 0.0
    %193 = vmatprep.subr.mxu0 0.0
    %194 = vmatpush1.msra.mxu0 0.0
    %195 = vmatprep.mubr.f32.mxu0 0.0
    %196 = vmatmul.mubr.f32.gmra.mrb[0].mxu0 %v126
    %v197 = vpop.f32.mrb[0].mxu0
    %v198 = vadd.f32 %v124, %v197
    %v199 = vpop.f32.mrb[0].mxu0
    %200 = vmatprep.mubr.f32.mxu0 0.0
    %201 = vmatmul.mubr.f32.gmra.mrb[0].mxu0 %v129
    %v202 = vpop.f32.mrb[0].mxu0
    %v203 = vadd.f32 %v124, %v202
    %v204 = vpop.f32.mrb[0].mxu0
    %205 = vdwg.mxu0
    %207 = vrot.lane.b32.xlu0 %v198, 96
    %v208 = vpop.permute.xlu0 %207
    %vm209 = vcmask 64512
    %v210 = vsel %vm209, %v198, 0
    %v212 = vsel %vm209, %v208, 0
    %214 = vmatprep.subr.mxu0 0.0
    %215 = vmatpush1.xpose.msra.mxu0 %v212
    %216 = vmatprep.subr.mxu0 0.0
    %217 = vmatpush1.xpose.msra.mxu0 0.0
    %218 = vmatprep.subr.mxu0 0.0
    %219 = vmatpush1.xpose.msra.mxu0 0.0
    %220 = vmatprep.subr.mxu0 0.0
    %221 = vmatpush1.xpose.msra.mxu0 0.0
    %222 = vmatprep.subr.mxu0 0.0
    %223 = vmatpush1.xpose.msra.mxu0 0.0
    %224 = vmatprep.subr.mxu0 0.0
    %225 = vmatpush1.xpose.msra.mxu0 0.0
    %226 = vmatprep.subr.mxu0 0.0
    %227 = vmatpush1.xpose.msra.mxu0 0.0
    %228 = vmatprep.subr.mxu0 0.0
    %229 = vmatpush1.xpose.msra.mxu0 0.0
    %230 = vmatprep.subr.mxu0 0.0
    %231 = vmatpush1.xpose.msra.mxu0 0.0
    %232 = vmatprep.subr.mxu0 0.0
    %233 = vmatpush1.xpose.msra.mxu0 0.0
    %234 = vmatprep.subr.mxu0 0.0
    %235 = vmatpush1.xpose.msra.mxu0 0.0
    %236 = vmatprep.subr.mxu0 0.0
    %237 = vmatpush1.xpose.msra.mxu0 0.0
    %238 = vmatprep.subr.mxu0 0.0
    %239 = vmatpush1.xpose.msra.mxu0 0.0
    %240 = vmatprep.subr.mxu0 0.0
    %241 = vmatpush1.xpose.msra.mxu0 0.0
    %242 = vmatprep.subr.mxu0 0.0
    %243 = vmatpush1.xpose.msra.mxu0 0.0
    %244 = vmatprep.subr.mxu0 0.0
    %245 = vmatpush1.xpose.msra.mxu0 0.0
    %246 = vmatprep.subr.mxu0 0.0
    %247 = vmatpush1.xpose.msra.mxu0 0.0
    %248 = vmatprep.subr.mxu0 0.0
    %249 = vmatpush1.xpose.msra.mxu0 0.0
    %250 = vmatprep.subr.mxu0 0.0
    %251 = vmatpush1.xpose.msra.mxu0 0.0
    %252 = vmatprep.subr.mxu0 0.0
    %253 = vmatpush1.xpose.msra.mxu0 0.0
    %254 = vmatprep.subr.mxu0 0.0
    %255 = vmatpush1.xpose.msra.mxu0 0.0
    %256 = vmatprep.subr.mxu0 0.0
    %257 = vmatpush1.xpose.msra.mxu0 0.0
    %258 = vmatprep.subr.mxu0 0.0
    %259 = vmatpush1.xpose.msra.mxu0 0.0
    %260 = vmatprep.subr.mxu0 0.0
    %261 = vmatpush1.xpose.msra.mxu0 0.0
    %262 = vmatprep.subr.mxu0 0.0
    %263 = vmatpush1.xpose.msra.mxu0 0.0
    %264 = vmatprep.subr.mxu0 0.0
    %265 = vmatpush1.xpose.msra.mxu0 0.0
    %266 = vmatprep.subr.mxu0 0.0
    %267 = vmatpush1.xpose.msra.mxu0 0.0
    %268 = vmatprep.subr.mxu0 0.0
    %269 = vmatpush1.xpose.msra.mxu0 0.0
    %270 = vmatprep.subr.mxu0 0.0
    %271 = vmatpush1.xpose.msra.mxu0 0.0
    %272 = vmatprep.subr.mxu0 0.0
    %273 = vmatpush1.xpose.msra.mxu0 0.0
    %274 = vmatprep.subr.mxu0 0.0
    %275 = vmatpush1.xpose.msra.mxu0 0.0
    %276 = vmatprep.subr.mxu0 0.0
    %277 = vmatpush1.xpose.msra.mxu0 0.0
    %278 = vmatprep.mubr.f32.mxu0 0.0
    %279 = vmatmul.mubr.f32.gmra.mrb[0].mxu0 %v210
    %v280 = vpop.f32.mrb[0].mxu0
    %v281 = vadd.f32 0.0, %v280
    %v282 = vpop.f32.mrb[0].mxu0
    %283 = vdwg.mxu0
    %285 = vrot.lane.b32.xlu0 %v203, 96
    %v286 = vpop.permute.xlu0 %285
    %v287 = vsel %vm209, %v203, 0
    %v289 = vsel %vm209, %v286, 0
    %291 = vmatprep.subr.mxu0 0.0
    %292 = vmatpush1.xpose.msra.mxu0 %v289
    %293 = vmatprep.subr.mxu0 0.0
    %294 = vmatpush1.xpose.msra.mxu0 0.0
    %295 = vmatprep.subr.mxu0 0.0
    %296 = vmatpush1.xpose.msra.mxu0 0.0
    %297 = vmatprep.subr.mxu0 0.0
    %298 = vmatpush1.xpose.msra.mxu0 0.0
    %299 = vmatprep.subr.mxu0 0.0
    %300 = vmatpush1.xpose.msra.mxu0 0.0
    %301 = vmatprep.subr.mxu0 0.0
    %302 = vmatpush1.xpose.msra.mxu0 0.0
    %303 = vmatprep.subr.mxu0 0.0
    %304 = vmatpush1.xpose.msra.mxu0 0.0
    %305 = vmatprep.subr.mxu0 0.0
    %306 = vmatpush1.xpose.msra.mxu0 0.0
    %307 = vmatprep.subr.mxu0 0.0
    %308 = vmatpush1.xpose.msra.mxu0 0.0
    %309 = vmatprep.subr.mxu0 0.0
    %310 = vmatpush1.xpose.msra.mxu0 0.0
    %311 = vmatprep.subr.mxu0 0.0
    %312 = vmatpush1.xpose.msra.mxu0 0.0
    %313 = vmatprep.subr.mxu0 0.0
    %314 = vmatpush1.xpose.msra.mxu0 0.0
    %315 = vmatprep.subr.mxu0 0.0
    %316 = vmatpush1.xpose.msra.mxu0 0.0
    %317 = vmatprep.subr.mxu0 0.0
    %318 = vmatpush1.xpose.msra.mxu0 0.0
    %319 = vmatprep.subr.mxu0 0.0
    %320 = vmatpush1.xpose.msra.mxu0 0.0
    %321 = vmatprep.subr.mxu0 0.0
    %322 = vmatpush1.xpose.msra.mxu0 0.0
    %323 = vmatprep.subr.mxu0 0.0
    %324 = vmatpush1.xpose.msra.mxu0 0.0
    %325 = vmatprep.subr.mxu0 0.0
    %326 = vmatpush1.xpose.msra.mxu0 0.0
    %327 = vmatprep.subr.mxu0 0.0
    %328 = vmatpush1.xpose.msra.mxu0 0.0
    %329 = vmatprep.subr.mxu0 0.0
    %330 = vmatpush1.xpose.msra.mxu0 0.0
    %331 = vmatprep.subr.mxu0 0.0
    %332 = vmatpush1.xpose.msra.mxu0 0.0
    %333 = vmatprep.subr.mxu0 0.0
    %334 = vmatpush1.xpose.msra.mxu0 0.0
    %335 = vmatprep.subr.mxu0 0.0
    %336 = vmatpush1.xpose.msra.mxu0 0.0
    %337 = vmatprep.subr.mxu0 0.0
    %338 = vmatpush1.xpose.msra.mxu0 0.0
    %339 = vmatprep.subr.mxu0 0.0
    %340 = vmatpush1.xpose.msra.mxu0 0.0
    %341 = vmatprep.subr.mxu0 0.0
    %342 = vmatpush1.xpose.msra.mxu0 0.0
    %343 = vmatprep.subr.mxu0 0.0
    %344 = vmatpush1.xpose.msra.mxu0 0.0
    %345 = vmatprep.subr.mxu0 0.0
    %346 = vmatpush1.xpose.msra.mxu0 0.0
    %347 = vmatprep.subr.mxu0 0.0
    %348 = vmatpush1.xpose.msra.mxu0 0.0
    %349 = vmatprep.subr.mxu0 0.0
    %350 = vmatpush1.xpose.msra.mxu0 0.0
    %351 = vmatprep.subr.mxu0 0.0
    %352 = vmatpush1.xpose.msra.mxu0 0.0
    %353 = vmatprep.subr.mxu0 0.0
    %354 = vmatpush1.xpose.msra.mxu0 0.0
    %355 = vmatprep.mubr.f32.mxu0 0.0
    %356 = vmatmul.mubr.f32.gmra.mrb[0].mxu0 %v287
    %v357 = vpop.f32.mrb[0].mxu0
    %v358 = vadd.f32 0.0, %v357
    %v359 = vpop.f32.mrb[0].mxu0
    %360 = vdwg.mxu0
    %v361 = vsel %vm209, %v281, -inf
    %362 = vmax.xlane.f32.xlu0 %v361
    %v363 = vpop.xlane.xlu0 %362
    %v364 = vsel %vm209, %v358, -inf
    %365 = vmax.xlane.f32.xlu0 %v364
    %v366 = vpop.xlane.xlu0 %365
    %v367 = vsub.f32 %v281, %v363
    %v368 = vsub.f32 %v358, %v366
    %v369 = vmul.f32 %v367, 1.442695
    %v370 = vpow.pop %v369
    %v371 = vmul.f32 %v368, 1.442695
    %v372 = vpow.pop %v371
    %v373 = vsel %vm209, %v370, 0.0
    %374 = vadd.xlane.f32.xlu0 %v373
    %v375 = vpop.xlane.xlu0 %374
    %v376 = vsel %vm209, %v372, 0.0
    %377 = vadd.xlane.f32.xlu0 %v376
    %v378 = vpop.xlane.xlu0 %377
    %v379 = vrcp.pop %v375
    %v380 = vrcp.pop %v378
    %v381 = vmul.f32 %v370, %v379
    %v382 = vmul.f32 %v372, %v380
    %383 = vrot.lane.b32.xlu0 %v198, 64
    %v384 = vpop.permute.xlu0 %383
    %v387 = vsel %vm209, %v381, 0
    %389 = vmatprep.subr.mxu0 0.0
    %390 = vmatpush1.msra.mxu0 %v384
    %391 = vmatprep.subr.mxu0 0.0
    %392 = vmatpush1.msra.mxu0 0.0
    %393 = vmatprep.subr.mxu0 0.0
    %394 = vmatpush1.msra.mxu0 0.0
    %395 = vmatprep.subr.mxu0 0.0
    %396 = vmatpush1.msra.mxu0 0.0
    %397 = vmatprep.subr.mxu0 0.0
    %398 = vmatpush1.msra.mxu0 0.0
    %399 = vmatprep.subr.mxu0 0.0
    %400 = vmatpush1.msra.mxu0 0.0
    %401 = vmatprep.subr.mxu0 0.0
    %402 = vmatpush1.msra.mxu0 0.0
    %403 = vmatprep.subr.mxu0 0.0
    %404 = vmatpush1.msra.mxu0 0.0
    %405 = vmatprep.subr.mxu0 0.0
    %406 = vmatpush1.msra.mxu0 0.0
    %407 = vmatprep.subr.mxu0 0.0
    %408 = vmatpush1.msra.mxu0 0.0
    %409 = vmatprep.subr.mxu0 0.0
    %410 = vmatpush1.msra.mxu0 0.0
    %411 = vmatprep.subr.mxu0 0.0
    %412 = vmatpush1.msra.mxu0 0.0
    %413 = vmatprep.subr.mxu0 0.0
    %414 = vmatpush1.msra.mxu0 0.0
    %415 = vmatprep.subr.mxu0 0.0
    %416 = vmatpush1.msra.mxu0 0.0
    %417 = vmatprep.subr.mxu0 0.0
    %418 = vmatpush1.msra.mxu0 0.0
    %419 = vmatprep.subr.mxu0 0.0
    %420 = vmatpush1.msra.mxu0 0.0
    %421 = vmatprep.subr.mxu0 0.0
    %422 = vmatpush1.msra.mxu0 0.0
    %423 = vmatprep.subr.mxu0 0.0
    %424 = vmatpush1.msra.mxu0 0.0
    %425 = vmatprep.subr.mxu0 0.0
    %426 = vmatpush1.msra.mxu0 0.0
    %427 = vmatprep.subr.mxu0 0.0
    %428 = vmatpush1.msra.mxu0 0.0
    %429 = vmatprep.subr.mxu0 0.0
    %430 = vmatpush1.msra.mxu0 0.0
    %431 = vmatprep.subr.mxu0 0.0
    %432 = vmatpush1.msra.mxu0 0.0
    %433 = vmatprep.subr.mxu0 0.0
    %434 = vmatpush1.msra.mxu0 0.0
    %435 = vmatprep.subr.mxu0 0.0
    %436 = vmatpush1.msra.mxu0 0.0
    %437 = vmatprep.subr.mxu0 0.0
    %438 = vmatpush1.msra.mxu0 0.0
    %439 = vmatprep.subr.mxu0 0.0
    %440 = vmatpush1.msra.mxu0 0.0
    %441 = vmatprep.subr.mxu0 0.0
    %442 = vmatpush1.msra.mxu0 0.0
    %443 = vmatprep.subr.mxu0 0.0
    %444 = vmatpush1.msra.mxu0 0.0
    %445 = vmatprep.subr.mxu0 0.0
    %446 = vmatpush1.msra.mxu0 0.0
    %447 = vmatprep.subr.mxu0 0.0
    %448 = vmatpush1.msra.mxu0 0.0
    %449 = vmatprep.subr.mxu0 0.0
    %450 = vmatpush1.msra.mxu0 0.0
    %451 = vmatprep.subr.mxu0 0.0
    %452 = vmatpush1.msra.mxu0 0.0
    %453 = vmatprep.mubr.f32.mxu0 0.0
    %454 = vmatmul.mubr.f32.gmra.mrb[0].mxu0 %v387
    %v455 = vpop.f32.mrb[0].mxu0
    %v456 = vadd.f32 0.0, %v455
    %v457 = vpop.f32.mrb[0].mxu0
    %458 = vdwg.mxu0
    %459 = vrot.lane.b32.xlu0 %v203, 64
    %v460 = vpop.permute.xlu0 %459
    %v463 = vsel %vm209, %v382, 0
    %465 = vmatprep.subr.mxu0 0.0
    %466 = vmatpush1.msra.mxu0 %v460
    %467 = vmatprep.subr.mxu0 0.0
    %468 = vmatpush1.msra.mxu0 0.0
    %469 = vmatprep.subr.mxu0 0.0
    %470 = vmatpush1.msra.mxu0 0.0
    %471 = vmatprep.subr.mxu0 0.0
    %472 = vmatpush1.msra.mxu0 0.0
    %473 = vmatprep.subr.mxu0 0.0
    %474 = vmatpush1.msra.mxu0 0.0
    %475 = vmatprep.subr.mxu0 0.0
    %476 = vmatpush1.msra.mxu0 0.0
    %477 = vmatprep.subr.mxu0 0.0
    %478 = vmatpush1.msra.mxu0 0.0
    %479 = vmatprep.subr.mxu0 0.0
    %480 = vmatpush1.msra.mxu0 0.0
    %481 = vmatprep.subr.mxu0 0.0
    %482 = vmatpush1.msra.mxu0 0.0
    %483 = vmatprep.subr.mxu0 0.0
    %484 = vmatpush1.msra.mxu0 0.0
    %485 = vmatprep.subr.mxu0 0.0
    %486 = vmatpush1.msra.mxu0 0.0
    %487 = vmatprep.subr.mxu0 0.0
    %488 = vmatpush1.msra.mxu0 0.0
    %489 = vmatprep.subr.mxu0 0.0
    %490 = vmatpush1.msra.mxu0 0.0
    %491 = vmatprep.subr.mxu0 0.0
    %492 = vmatpush1.msra.mxu0 0.0
    %493 = vmatprep.subr.mxu0 0.0
    %494 = vmatpush1.msra.mxu0 0.0
    %495 = vmatprep.subr.mxu0 0.0
    %496 = vmatpush1.msra.mxu0 0.0
    %497 = vmatprep.subr.mxu0 0.0
    %498 = vmatpush1.msra.mxu0 0.0
    %499 = vmatprep.subr.mxu0 0.0
    %500 = vmatpush1.msra.mxu0 0.0
    %501 = vmatprep.subr.mxu0 0.0
    %502 = vmatpush1.msra.mxu0 0.0
    %503 = vmatprep.subr.mxu0 0.0
    %504 = vmatpush1.msra.mxu0 0.0
    %505 = vmatprep.subr.mxu0 0.0
    %506 = vmatpush1.msra.mxu0 0.0
    %507 = vmatprep.subr.mxu0 0.0
    %508 = vmatpush1.msra.mxu0 0.0
    %509 = vmatprep.subr.mxu0 0.0
    %510 = vmatpush1.msra.mxu0 0.0
    %511 = vmatprep.subr.mxu0 0.0
    %512 = vmatpush1.msra.mxu0 0.0
    %513 = vmatprep.subr.mxu0 0.0
    %514 = vmatpush1.msra.mxu0 0.0
    %515 = vmatprep.subr.mxu0 0.0
    %516 = vmatpush1.msra.mxu0 0.0
    %517 = vmatprep.subr.mxu0 0.0
    %518 = vmatpush1.msra.mxu0 0.0
    %519 = vmatprep.subr.mxu0 0.0
    %520 = vmatpush1.msra.mxu0 0.0
    %521 = vmatprep.subr.mxu0 0.0
    %522 = vmatpush1.msra.mxu0 0.0
    %523 = vmatprep.subr.mxu0 0.0
    %524 = vmatpush1.msra.mxu0 0.0
    %525 = vmatprep.subr.mxu0 0.0
    %526 = vmatpush1.msra.mxu0 0.0
    %527 = vmatprep.subr.mxu0 0.0
    %528 = vmatpush1.msra.mxu0 0.0
    %529 = vmatprep.mubr.f32.mxu0 0.0
    %530 = vmatmul.mubr.f32.gmra.mrb[0].mxu0 %v463
    %v531 = vpop.f32.mrb[0].mxu0
    %v532 = vadd.f32 0.0, %v531
    %v533 = vpop.f32.mrb[0].mxu0
    %534 = vdwg.mxu0
    %535 = vrot.lane.b32.xlu0 %v198, 120
    %v536 = vpop.permute.xlu0 %535
    %537 = vrot.lane.b32.xlu0 %v198, 88
    %v538 = vpop.permute.xlu0 %537
    %v539 = vsel %vm209, %v536, 0
    %v541 = vsel %vm209, %v538, 0
    %543 = vmatprep.subr.mxu0 0.0
    %544 = vmatpush1.xpose.msra.mxu0 %v541
    %545 = vmatprep.subr.mxu0 0.0
    %546 = vmatpush1.xpose.msra.mxu0 0.0
    %547 = vmatprep.subr.mxu0 0.0
    %548 = vmatpush1.xpose.msra.mxu0 0.0
    %549 = vmatprep.subr.mxu0 0.0
    %550 = vmatpush1.xpose.msra.mxu0 0.0
    %551 = vmatprep.subr.mxu0 0.0
    %552 = vmatpush1.xpose.msra.mxu0 0.0
    %553 = vmatprep.subr.mxu0 0.0
    %554 = vmatpush1.xpose.msra.mxu0 0.0
    %555 = vmatprep.subr.mxu0 0.0
    %556 = vmatpush1.xpose.msra.mxu0 0.0
    %557 = vmatprep.subr.mxu0 0.0
    %558 = vmatpush1.xpose.msra.mxu0 0.0
    %559 = vmatprep.subr.mxu0 0.0
    %560 = vmatpush1.xpose.msra.mxu0 0.0
    %561 = vmatprep.subr.mxu0 0.0
    %562 = vmatpush1.xpose.msra.mxu0 0.0
    %563 = vmatprep.subr.mxu0 0.0
    %564 = vmatpush1.xpose.msra.mxu0 0.0
    %565 = vmatprep.subr.mxu0 0.0
    %566 = vmatpush1.xpose.msra.mxu0 0.0
    %567 = vmatprep.subr.mxu0 0.0
    %568 = vmatpush1.xpose.msra.mxu0 0.0
    %569 = vmatprep.subr.mxu0 0.0
    %570 = vmatpush1.xpose.msra.mxu0 0.0
    %571 = vmatprep.subr.mxu0 0.0
    %572 = vmatpush1.xpose.msra.mxu0 0.0
    %573 = vmatprep.subr.mxu0 0.0
    %574 = vmatpush1.xpose.msra.mxu0 0.0
    %575 = vmatprep.subr.mxu0 0.0
    %576 = vmatpush1.xpose.msra.mxu0 0.0
    %577 = vmatprep.subr.mxu0 0.0
    %578 = vmatpush1.xpose.msra.mxu0 0.0
    %579 = vmatprep.subr.mxu0 0.0
    %580 = vmatpush1.xpose.msra.mxu0 0.0
    %581 = vmatprep.subr.mxu0 0.0
    %582 = vmatpush1.xpose.msra.mxu0 0.0
    %583 = vmatprep.subr.mxu0 0.0
    %584 = vmatpush1.xpose.msra.mxu0 0.0
    %585 = vmatprep.subr.mxu0 0.0
    %586 = vmatpush1.xpose.msra.mxu0 0.0
    %587 = vmatprep.subr.mxu0 0.0
    %588 = vmatpush1.xpose.msra.mxu0 0.0
    %589 = vmatprep.subr.mxu0 0.0
    %590 = vmatpush1.xpose.msra.mxu0 0.0
    %591 = vmatprep.subr.mxu0 0.0
    %592 = vmatpush1.xpose.msra.mxu0 0.0
    %593 = vmatprep.subr.mxu0 0.0
    %594 = vmatpush1.xpose.msra.mxu0 0.0
    %595 = vmatprep.subr.mxu0 0.0
    %596 = vmatpush1.xpose.msra.mxu0 0.0
    %597 = vmatprep.subr.mxu0 0.0
    %598 = vmatpush1.xpose.msra.mxu0 0.0
    %599 = vmatprep.subr.mxu0 0.0
    %600 = vmatpush1.xpose.msra.mxu0 0.0
    %601 = vmatprep.subr.mxu0 0.0
    %602 = vmatpush1.xpose.msra.mxu0 0.0
    %603 = vmatprep.subr.mxu0 0.0
    %604 = vmatpush1.xpose.msra.mxu0 0.0
    %605 = vmatprep.subr.mxu0 0.0
    %606 = vmatpush1.xpose.msra.mxu0 0.0
    %607 = vmatprep.mubr.f32.mxu0 0.0
    %608 = vmatmul.mubr.f32.gmra.mrb[0].mxu0 %v539
    %v609 = vpop.f32.mrb[0].mxu0
    %v610 = vadd.f32 0.0, %v609
    %v611 = vpop.f32.mrb[0].mxu0
    %612 = vdwg.mxu0
    %613 = vrot.lane.b32.xlu0 %v203, 120
    %v614 = vpop.permute.xlu0 %613
    %615 = vrot.lane.b32.xlu0 %v203, 88
    %v616 = vpop.permute.xlu0 %615
    %v617 = vsel %vm209, %v614, 0
    %v619 = vsel %vm209, %v616, 0
    %621 = vmatprep.subr.mxu0 0.0
    %622 = vmatpush1.xpose.msra.mxu0 %v619
    %623 = vmatprep.subr.mxu0 0.0
    %624 = vmatpush1.xpose.msra.mxu0 0.0
    %625 = vmatprep.subr.mxu0 0.0
    %626 = vmatpush1.xpose.msra.mxu0 0.0
    %627 = vmatprep.subr.mxu0 0.0
    %628 = vmatpush1.xpose.msra.mxu0 0.0
    %629 = vmatprep.subr.mxu0 0.0
    %630 = vmatpush1.xpose.msra.mxu0 0.0
    %631 = vmatprep.subr.mxu0 0.0
    %632 = vmatpush1.xpose.msra.mxu0 0.0
    %633 = vmatprep.subr.mxu0 0.0
    %634 = vmatpush1.xpose.msra.mxu0 0.0
    %635 = vmatprep.subr.mxu0 0.0
    %636 = vmatpush1.xpose.msra.mxu0 0.0
    %637 = vmatprep.subr.mxu0 0.0
    %638 = vmatpush1.xpose.msra.mxu0 0.0
    %639 = vmatprep.subr.mxu0 0.0
    %640 = vmatpush1.xpose.msra.mxu0 0.0
    %641 = vmatprep.subr.mxu0 0.0
    %642 = vmatpush1.xpose.msra.mxu0 0.0
    %643 = vmatprep.subr.mxu0 0.0
    %644 = vmatpush1.xpose.msra.mxu0 0.0
    %645 = vmatprep.subr.mxu0 0.0
    %646 = vmatpush1.xpose.msra.mxu0 0.0
    %647 = vmatprep.subr.mxu0 0.0
    %648 = vmatpush1.xpose.msra.mxu0 0.0
    %649 = vmatprep.subr.mxu0 0.0
    %650 = vmatpush1.xpose.msra.mxu0 0.0
    %651 = vmatprep.subr.mxu0 0.0
    %652 = vmatpush1.xpose.msra.mxu0 0.0
    %653 = vmatprep.subr.mxu0 0.0
    %654 = vmatpush1.xpose.msra.mxu0 0.0
    %655 = vmatprep.subr.mxu0 0.0
    %656 = vmatpush1.xpose.msra.mxu0 0.0
    %657 = vmatprep.subr.mxu0 0.0
    %658 = vmatpush1.xpose.msra.mxu0 0.0
    %659 = vmatprep.subr.mxu0 0.0
    %660 = vmatpush1.xpose.msra.mxu0 0.0
    %661 = vmatprep.subr.mxu0 0.0
    %662 = vmatpush1.xpose.msra.mxu0 0.0
    %663 = vmatprep.subr.mxu0 0.0
    %664 = vmatpush1.xpose.msra.mxu0 0.0
    %665 = vmatprep.subr.mxu0 0.0
    %666 = vmatpush1.xpose.msra.mxu0 0.0
    %667 = vmatprep.subr.mxu0 0.0
    %668 = vmatpush1.xpose.msra.mxu0 0.0
    %669 = vmatprep.subr.mxu0 0.0
    %670 = vmatpush1.xpose.msra.mxu0 0.0
    %671 = vmatprep.subr.mxu0 0.0
    %672 = vmatpush1.xpose.msra.mxu0 0.0
    %673 = vmatprep.subr.mxu0 0.0
    %674 = vmatpush1.xpose.msra.mxu0 0.0
    %675 = vmatprep.subr.mxu0 0.0
    %676 = vmatpush1.xpose.msra.mxu0 0.0
    %677 = vmatprep.subr.mxu0 0.0
    %678 = vmatpush1.xpose.msra.mxu0 0.0
    %679 = vmatprep.subr.mxu0 0.0
    %680 = vmatpush1.xpose.msra.mxu0 0.0
    %681 = vmatprep.subr.mxu0 0.0
    %682 = vmatpush1.xpose.msra.mxu0 0.0
    %683 = vmatprep.subr.mxu0 0.0
    %684 = vmatpush1.xpose.msra.mxu0 0.0
    %685 = vmatprep.mubr.f32.mxu0 0.0
    %686 = vmatmul.mubr.f32.gmra.mrb[0].mxu0 %v617
    %v687 = vpop.f32.mrb[0].mxu0
    %v688 = vadd.f32 0.0, %v687
    %v689 = vpop.f32.mrb[0].mxu0
    %690 = vdwg.mxu0
    %v691 = vsel %vm209, %v610, -inf
    %692 = vmax.xlane.f32.xlu0 %v691
    %v693 = vpop.xlane.xlu0 %692
    %v694 = vsel %vm209, %v688, -inf
    %695 = vmax.xlane.f32.xlu0 %v694
    %v696 = vpop.xlane.xlu0 %695
    %v697 = vsub.f32 %v610, %v693
    %v698 = vsub.f32 %v688, %v696
    %v699 = vmul.f32 %v697, 1.442695
    %v700 = vpow.pop %v699
    %v701 = vmul.f32 %v698, 1.442695
    %v702 = vpow.pop %v701
    %v703 = vsel %vm209, %v700, 0.0
    %704 = vadd.xlane.f32.xlu0 %v703
    %v705 = vpop.xlane.xlu0 %704
    %v706 = vsel %vm209, %v702, 0.0
    %707 = vadd.xlane.f32.xlu0 %v706
    %v708 = vpop.xlane.xlu0 %707
    %v709 = vrcp.pop %v705
    %v710 = vrcp.pop %v708
    %v711 = vmul.f32 %v700, %v709
    %v712 = vmul.f32 %v702, %v710
    %713 = vrot.lane.b32.xlu0 %v198, 56
    %v714 = vpop.permute.xlu0 %713
    %v717 = vsel %vm209, %v711, 0
    %719 = vmatprep.subr.mxu0 0.0
    %720 = vmatpush1.msra.mxu0 %v714
    %721 = vmatprep.subr.mxu0 0.0
    %722 = vmatpush1.msra.mxu0 0.0
    %723 = vmatprep.subr.mxu0 0.0
    %724 = vmatpush1.msra.mxu0 0.0
    %725 = vmatprep.subr.mxu0 0.0
    %726 = vmatpush1.msra.mxu0 0.0
    %727 = vmatprep.subr.mxu0 0.0
    %728 = vmatpush1.msra.mxu0 0.0
    %729 = vmatprep.subr.mxu0 0.0
    %730 = vmatpush1.msra.mxu0 0.0
    %731 = vmatprep.subr.mxu0 0.0
    %732 = vmatpush1.msra.mxu0 0.0
    %733 = vmatprep.subr.mxu0 0.0
    %734 = vmatpush1.msra.mxu0 0.0
    %735 = vmatprep.subr.mxu0 0.0
    %736 = vmatpush1.msra.mxu0 0.0
    %737 = vmatprep.subr.mxu0 0.0
    %738 = vmatpush1.msra.mxu0 0.0
    %739 = vmatprep.subr.mxu0 0.0
    %740 = vmatpush1.msra.mxu0 0.0
    %741 = vmatprep.subr.mxu0 0.0
    %742 = vmatpush1.msra.mxu0 0.0
    %743 = vmatprep.subr.mxu0 0.0
    %744 = vmatpush1.msra.mxu0 0.0
    %745 = vmatprep.subr.mxu0 0.0
    %746 = vmatpush1.msra.mxu0 0.0
    %747 = vmatprep.subr.mxu0 0.0
    %748 = vmatpush1.msra.mxu0 0.0
    %749 = vmatprep.subr.mxu0 0.0
    %750 = vmatpush1.msra.mxu0 0.0
    %751 = vmatprep.subr.mxu0 0.0
    %752 = vmatpush1.msra.mxu0 0.0
    %753 = vmatprep.subr.mxu0 0.0
    %754 = vmatpush1.msra.mxu0 0.0
    %755 = vmatprep.subr.mxu0 0.0
    %756 = vmatpush1.msra.mxu0 0.0
    %757 = vmatprep.subr.mxu0 0.0
    %758 = vmatpush1.msra.mxu0 0.0
    %759 = vmatprep.subr.mxu0 0.0
    %760 = vmatpush1.msra.mxu0 0.0
    %761 = vmatprep.subr.mxu0 0.0
    %762 = vmatpush1.msra.mxu0 0.0
    %763 = vmatprep.subr.mxu0 0.0
    %764 = vmatpush1.msra.mxu0 0.0
    %765 = vmatprep.subr.mxu0 0.0
    %766 = vmatpush1.msra.mxu0 0.0
    %767 = vmatprep.subr.mxu0 0.0
    %768 = vmatpush1.msra.mxu0 0.0
    %769 = vmatprep.subr.mxu0 0.0
    %770 = vmatpush1.msra.mxu0 0.0
    %771 = vmatprep.subr.mxu0 0.0
    %772 = vmatpush1.msra.mxu0 0.0
    %773 = vmatprep.subr.mxu0 0.0
    %774 = vmatpush1.msra.mxu0 0.0
    %775 = vmatprep.subr.mxu0 0.0
    %776 = vmatpush1.msra.mxu0 0.0
    %777 = vmatprep.subr.mxu0 0.0
    %778 = vmatpush1.msra.mxu0 0.0
    %779 = vmatprep.subr.mxu0 0.0
    %780 = vmatpush1.msra.mxu0 0.0
    %781 = vmatprep.subr.mxu0 0.0
    %782 = vmatpush1.msra.mxu0 0.0
    %783 = vmatprep.mubr.f32.mxu0 0.0
    %784 = vmatmul.mubr.f32.gmra.mrb[0].mxu0 %v717
    %v785 = vpop.f32.mrb[0].mxu0
    %v786 = vadd.f32 0.0, %v785
    %v787 = vpop.f32.mrb[0].mxu0
    %788 = vdwg.mxu0
    %789 = vrot.lane.b32.xlu0 %v203, 56
    %v790 = vpop.permute.xlu0 %789
    %v793 = vsel %vm209, %v712, 0
    %795 = vmatprep.subr.mxu0 0.0
    %796 = vmatpush1.msra.mxu0 %v790
    %797 = vmatprep.subr.mxu0 0.0
    %798 = vmatpush1.msra.mxu0 0.0
    %799 = vmatprep.subr.mxu0 0.0
    %800 = vmatpush1.msra.mxu0 0.0
    %801 = vmatprep.subr.mxu0 0.0
    %802 = vmatpush1.msra.mxu0 0.0
    %803 = vmatprep.subr.mxu0 0.0
    %804 = vmatpush1.msra.mxu0 0.0
    %805 = vmatprep.subr.mxu0 0.0
    %806 = vmatpush1.msra.mxu0 0.0
    %807 = vmatprep.subr.mxu0 0.0
    %808 = vmatpush1.msra.mxu0 0.0
    %809 = vmatprep.subr.mxu0 0.0
    %810 = vmatpush1.msra.mxu0 0.0
    %811 = vmatprep.subr.mxu0 0.0
    %812 = vmatpush1.msra.mxu0 0.0
    %813 = vmatprep.subr.mxu0 0.0
    %814 = vmatpush1.msra.mxu0 0.0
    %815 = vmatprep.subr.mxu0 0.0
    %816 = vmatpush1.msra.mxu0 0.0
    %817 = vmatprep.subr.mxu0 0.0
    %818 = vmatpush1.msra.mxu0 0.0
    %819 = vmatprep.subr.mxu0 0.0
    %820 = vmatpush1.msra.mxu0 0.0
    %821 = vmatprep.subr.mxu0 0.0
    %822 = vmatpush1.msra.mxu0 0.0
    %823 = vmatprep.subr.mxu0 0.0
    %824 = vmatpush1.msra.mxu0 0.0
    %825 = vmatprep.subr.mxu0 0.0
    %826 = vmatpush1.msra.mxu0 0.0
    %827 = vmatprep.subr.mxu0 0.0
    %828 = vmatpush1.msra.mxu0 0.0
    %829 = vmatprep.subr.mxu0 0.0
    %830 = vmatpush1.msra.mxu0 0.0
    %831 = vmatprep.subr.mxu0 0.0
    %832 = vmatpush1.msra.mxu0 0.0
    %833 = vmatprep.subr.mxu0 0.0
    %834 = vmatpush1.msra.mxu0 0.0
    %835 = vmatprep.subr.mxu0 0.0
    %836 = vmatpush1.msra.mxu0 0.0
    %837 = vmatprep.subr.mxu0 0.0
    %838 = vmatpush1.msra.mxu0 0.0
    %839 = vmatprep.subr.mxu0 0.0
    %840 = vmatpush1.msra.mxu0 0.0
    %841 = vmatprep.subr.mxu0 0.0
    %842 = vmatpush1.msra.mxu0 0.0
    %843 = vmatprep.subr.mxu0 0.0
    %844 = vmatpush1.msra.mxu0 0.0
    %845 = vmatprep.subr.mxu0 0.0
    %846 = vmatpush1.msra.mxu0 0.0
    %847 = vmatprep.subr.mxu0 0.0
    %848 = vmatpush1.msra.mxu0 0.0
    %849 = vmatprep.subr.mxu0 0.0
    %850 = vmatpush1.msra.mxu0 0.0
    %851 = vmatprep.subr.mxu0 0.0
    %852 = vmatpush1.msra.mxu0 0.0
    %853 = vmatprep.subr.mxu0 0.0
    %854 = vmatpush1.msra.mxu0 0.0
    %855 = vmatprep.subr.mxu0 0.0
    %856 = vmatpush1.msra.mxu0 0.0
    %857 = vmatprep.subr.mxu0 0.0
    %858 = vmatpush1.msra.mxu0 0.0
    %859 = vmatprep.mubr.f32.mxu0 0.0
    %860 = vmatmul.mubr.f32.gmra.mrb[0].mxu0 %v793
    %v861 = vpop.f32.mrb[0].mxu0
    %v862 = vadd.f32 0.0, %v861
    %v863 = vpop.f32.mrb[0].mxu0
    %864 = vdwg.mxu0
    %865 = vrot.lane.b32.xlu0 %v198, 112
    %v866 = vpop.permute.xlu0 %865
    %867 = vrot.lane.b32.xlu0 %v198, 80
    %v868 = vpop.permute.xlu0 %867
    %v869 = vsel %vm209, %v866, 0
    %v871 = vsel %vm209, %v868, 0
    %873 = vmatprep.subr.mxu0 0.0
    %874 = vmatpush1.xpose.msra.mxu0 %v871
    %875 = vmatprep.subr.mxu0 0.0
    %876 = vmatpush1.xpose.msra.mxu0 0.0
    %877 = vmatprep.subr.mxu0 0.0
    %878 = vmatpush1.xpose.msra.mxu0 0.0
    %879 = vmatprep.subr.mxu0 0.0
    %880 = vmatpush1.xpose.msra.mxu0 0.0
    %881 = vmatprep.subr.mxu0 0.0
    %882 = vmatpush1.xpose.msra.mxu0 0.0
    %883 = vmatprep.subr.mxu0 0.0
    %884 = vmatpush1.xpose.msra.mxu0 0.0
    %885 = vmatprep.subr.mxu0 0.0
    %886 = vmatpush1.xpose.msra.mxu0 0.0
    %887 = vmatprep.subr.mxu0 0.0
    %888 = vmatpush1.xpose.msra.mxu0 0.0
    %889 = vmatprep.subr.mxu0 0.0
    %890 = vmatpush1.xpose.msra.mxu0 0.0
    %891 = vmatprep.subr.mxu0 0.0
    %892 = vmatpush1.xpose.msra.mxu0 0.0
    %893 = vmatprep.subr.mxu0 0.0
    %894 = vmatpush1.xpose.msra.mxu0 0.0
    %895 = vmatprep.subr.mxu0 0.0
    %896 = vmatpush1.xpose.msra.mxu0 0.0
    %897 = vmatprep.subr.mxu0 0.0
    %898 = vmatpush1.xpose.msra.mxu0 0.0
    %899 = vmatprep.subr.mxu0 0.0
    %900 = vmatpush1.xpose.msra.mxu0 0.0
    %901 = vmatprep.subr.mxu0 0.0
    %902 = vmatpush1.xpose.msra.mxu0 0.0
    %903 = vmatprep.subr.mxu0 0.0
    %904 = vmatpush1.xpose.msra.mxu0 0.0
    %905 = vmatprep.subr.mxu0 0.0
    %906 = vmatpush1.xpose.msra.mxu0 0.0
    %907 = vmatprep.subr.mxu0 0.0
    %908 = vmatpush1.xpose.msra.mxu0 0.0
    %909 = vmatprep.subr.mxu0 0.0
    %910 = vmatpush1.xpose.msra.mxu0 0.0
    %911 = vmatprep.subr.mxu0 0.0
    %912 = vmatpush1.xpose.msra.mxu0 0.0
    %913 = vmatprep.subr.mxu0 0.0
    %914 = vmatpush1.xpose.msra.mxu0 0.0
    %915 = vmatprep.subr.mxu0 0.0
    %916 = vmatpush1.xpose.msra.mxu0 0.0
    %917 = vmatprep.subr.mxu0 0.0
    %918 = vmatpush1.xpose.msra.mxu0 0.0
    %919 = vmatprep.subr.mxu0 0.0
    %920 = vmatpush1.xpose.msra.mxu0 0.0
    %921 = vmatprep.subr.mxu0 0.0
    %922 = vmatpush1.xpose.msra.mxu0 0.0
    %923 = vmatprep.subr.mxu0 0.0
    %924 = vmatpush1.xpose.msra.mxu0 0.0
    %925 = vmatprep.subr.mxu0 0.0
    %926 = vmatpush1.xpose.msra.mxu0 0.0
    %927 = vmatprep.subr.mxu0 0.0
    %928 = vmatpush1.xpose.msra.mxu0 0.0
    %929 = vmatprep.subr.mxu0 0.0
    %930 = vmatpush1.xpose.msra.mxu0 0.0
    %931 = vmatprep.subr.mxu0 0.0
    %932 = vmatpush1.xpose.msra.mxu0 0.0
    %933 = vmatprep.subr.mxu0 0.0
    %934 = vmatpush1.xpose.msra.mxu0 0.0
    %935 = vmatprep.subr.mxu0 0.0
    %936 = vmatpush1.xpose.msra.mxu0 0.0
    %937 = vmatprep.mubr.f32.mxu0 0.0
    %938 = vmatmul.mubr.f32.gmra.mrb[0].mxu0 %v869
    %v939 = vpop.f32.mrb[0].mxu0
    %v940 = vadd.f32 0.0, %v939
    %v941 = vpop.f32.mrb[0].mxu0
    %942 = vdwg.mxu0
    %943 = vrot.lane.b32.xlu0 %v203, 112
    %v944 = vpop.permute.xlu0 %943
    %945 = vrot.lane.b32.xlu0 %v203, 80
    %v946 = vpop.permute.xlu0 %945
    %v947 = vsel %vm209, %v944, 0
    %v949 = vsel %vm209, %v946, 0
    %951 = vmatprep.subr.mxu0 0.0
    %952 = vmatpush1.xpose.msra.mxu0 %v949
    %953 = vmatprep.subr.mxu0 0.0
    %954 = vmatpush1.xpose.msra.mxu0 0.0
    %955 = vmatprep.subr.mxu0 0.0
    %956 = vmatpush1.xpose.msra.mxu0 0.0
    %957 = vmatprep.subr.mxu0 0.0
    %958 = vmatpush1.xpose.msra.mxu0 0.0
    %959 = vmatprep.subr.mxu0 0.0
    %960 = vmatpush1.xpose.msra.mxu0 0.0
    %961 = vmatprep.subr.mxu0 0.0
    %962 = vmatpush1.xpose.msra.mxu0 0.0
    %963 = vmatprep.subr.mxu0 0.0
    %964 = vmatpush1.xpose.msra.mxu0 0.0
    %965 = vmatprep.subr.mxu0 0.0
    %966 = vmatpush1.xpose.msra.mxu0 0.0
    %967 = vmatprep.subr.mxu0 0.0
    %968 = vmatpush1.xpose.msra.mxu0 0.0
    %969 = vmatprep.subr.mxu0 0.0
    %970 = vmatpush1.xpose.msra.mxu0 0.0
    %971 = vmatprep.subr.mxu0 0.0
    %972 = vmatpush1.xpose.msra.mxu0 0.0
    %973 = vmatprep.subr.mxu0 0.0
    %974 = vmatpush1.xpose.msra.mxu0 0.0
    %975 = vmatprep.subr.mxu0 0.0
    %976 = vmatpush1.xpose.msra.mxu0 0.0
    %977 = vmatprep.subr.mxu0 0.0
    %978 = vmatpush1.xpose.msra.mxu0 0.0
    %979 = vmatprep.subr.mxu0 0.0
    %980 = vmatpush1.xpose.msra.mxu0 0.0
    %981 = vmatprep.subr.mxu0 0.0
    %982 = vmatpush1.xpose.msra.mxu0 0.0
    %983 = vmatprep.subr.mxu0 0.0
    %984 = vmatpush1.xpose.msra.mxu0 0.0
    %985 = vmatprep.subr.mxu0 0.0
    %986 = vmatpush1.xpose.msra.mxu0 0.0
    %987 = vmatprep.subr.mxu0 0.0
    %988 = vmatpush1.xpose.msra.mxu0 0.0
    %989 = vmatprep.subr.mxu0 0.0
    %990 = vmatpush1.xpose.msra.mxu0 0.0
    %991 = vmatprep.subr.mxu0 0.0
    %992 = vmatpush1.xpose.msra.mxu0 0.0
    %993 = vmatprep.subr.mxu0 0.0
    %994 = vmatpush1.xpose.msra.mxu0 0.0
    %995 = vmatprep.subr.mxu0 0.0
    %996 = vmatpush1.xpose.msra.mxu0 0.0
    %997 = vmatprep.subr.mxu0 0.0
    %998 = vmatpush1.xpose.msra.mxu0 0.0
    %999 = vmatprep.subr.mxu0 0.0
    %1000 = vmatpush1.xpose.msra.mxu0 0.0
    %1001 = vmatprep.subr.mxu0 0.0
    %1002 = vmatpush1.xpose.msra.mxu0 0.0
    %1003 = vmatprep.subr.mxu0 0.0
    %1004 = vmatpush1.xpose.msra.mxu0 0.0
    %1005 = vmatprep.subr.mxu0 0.0
    %1006 = vmatpush1.xpose.msra.mxu0 0.0
    %1007 = vmatprep.subr.mxu0 0.0
    %1008 = vmatpush1.xpose.msra.mxu0 0.0
    %1009 = vmatprep.subr.mxu0 0.0
    %1010 = vmatpush1.xpose.msra.mxu0 0.0
    %1011 = vmatprep.subr.mxu0 0.0
    %1012 = vmatpush1.xpose.msra.mxu0 0.0
    %1013 = vmatprep.subr.mxu0 0.0
    %1014 = vmatpush1.xpose.msra.mxu0 0.0
    %1015 = vmatprep.mubr.f32.mxu0 0.0
    %1016 = vmatmul.mubr.f32.gmra.mrb[0].mxu0 %v947
    %v1017 = vpop.f32.mrb[0].mxu0
    %v1018 = vadd.f32 0.0, %v1017
    %v1019 = vpop.f32.mrb[0].mxu0
    %1020 = vdwg.mxu0
    %v1021 = vsel %vm209, %v940, -inf
    %1022 = vmax.xlane.f32.xlu0 %v1021
    %v1023 = vpop.xlane.xlu0 %1022
    %v1024 = vsel %vm209, %v1018, -inf
    %1025 = vmax.xlane.f32.xlu0 %v1024
    %v1026 = vpop.xlane.xlu0 %1025
    %v1027 = vsub.f32 %v940, %v1023
    %v1028 = vsub.f32 %v1018, %v1026
    %v1029 = vmul.f32 %v1027, 1.442695
    %v1030 = vpow.pop %v1029
    %v1031 = vmul.f32 %v1028, 1.442695
    %v1032 = vpow.pop %v1031
    %v1033 = vsel %vm209, %v1030, 0.0
    %1034 = vadd.xlane.f32.xlu0 %v1033
    %v1035 = vpop.xlane.xlu0 %1034
    %v1036 = vsel %vm209, %v1032, 0.0
    %1037 = vadd.xlane.f32.xlu0 %v1036
    %v1038 = vpop.xlane.xlu0 %1037
    %v1039 = vrcp.pop %v1035
    %v1040 = vrcp.pop %v1038
    %v1041 = vmul.f32 %v1030, %v1039
    %v1042 = vmul.f32 %v1032, %v1040
    %1043 = vrot.lane.b32.xlu0 %v198, 48
    %v1044 = vpop.permute.xlu0 %1043
    %v1047 = vsel %vm209, %v1041, 0
    %1049 = vmatprep.subr.mxu0 0.0
    %1050 = vmatpush1.msra.mxu0 %v1044
    %1051 = vmatprep.subr.mxu0 0.0
    %1052 = vmatpush1.msra.mxu0 0.0
    %1053 = vmatprep.subr.mxu0 0.0
    %1054 = vmatpush1.msra.mxu0 0.0
    %1055 = vmatprep.subr.mxu0 0.0
    %1056 = vmatpush1.msra.mxu0 0.0
    %1057 = vmatprep.subr.mxu0 0.0
    %1058 = vmatpush1.msra.mxu0 0.0
    %1059 = vmatprep.subr.mxu0 0.0
    %1060 = vmatpush1.msra.mxu0 0.0
    %1061 = vmatprep.subr.mxu0 0.0
    %1062 = vmatpush1.msra.mxu0 0.0
    %1063 = vmatprep.subr.mxu0 0.0
    %1064 = vmatpush1.msra.mxu0 0.0
    %1065 = vmatprep.subr.mxu0 0.0
    %1066 = vmatpush1.msra.mxu0 0.0
    %1067 = vmatprep.subr.mxu0 0.0
    %1068 = vmatpush1.msra.mxu0 0.0
    %1069 = vmatprep.subr.mxu0 0.0
    %1070 = vmatpush1.msra.mxu0 0.0
    %1071 = vmatprep.subr.mxu0 0.0
    %1072 = vmatpush1.msra.mxu0 0.0
    %1073 = vmatprep.subr.mxu0 0.0
    %1074 = vmatpush1.msra.mxu0 0.0
    %1075 = vmatprep.subr.mxu0 0.0
    %1076 = vmatpush1.msra.mxu0 0.0
    %1077 = vmatprep.subr.mxu0 0.0
    %1078 = vmatpush1.msra.mxu0 0.0
    %1079 = vmatprep.subr.mxu0 0.0
    %1080 = vmatpush1.msra.mxu0 0.0
    %1081 = vmatprep.subr.mxu0 0.0
    %1082 = vmatpush1.msra.mxu0 0.0
    %1083 = vmatprep.subr.mxu0 0.0
    %1084 = vmatpush1.msra.mxu0 0.0
    %1085 = vmatprep.subr.mxu0 0.0
    %1086 = vmatpush1.msra.mxu0 0.0
    %1087 = vmatprep.subr.mxu0 0.0
    %1088 = vmatpush1.msra.mxu0 0.0
    %1089 = vmatprep.subr.mxu0 0.0
    %1090 = vmatpush1.msra.mxu0 0.0
    %1091 = vmatprep.subr.mxu0 0.0
    %1092 = vmatpush1.msra.mxu0 0.0
    %1093 = vmatprep.subr.mxu0 0.0
    %1094 = vmatpush1.msra.mxu0 0.0
    %1095 = vmatprep.subr.mxu0 0.0
    %1096 = vmatpush1.msra.mxu0 0.0
    %1097 = vmatprep.subr.mxu0 0.0
    %1098 = vmatpush1.msra.mxu0 0.0
    %1099 = vmatprep.subr.mxu0 0.0
    %1100 = vmatpush1.msra.mxu0 0.0
    %1101 = vmatprep.subr.mxu0 0.0
    %1102 = vmatpush1.msra.mxu0 0.0
    %1103 = vmatprep.subr.mxu0 0.0
    %1104 = vmatpush1.msra.mxu0 0.0
    %1105 = vmatprep.subr.mxu0 0.0
    %1106 = vmatpush1.msra.mxu0 0.0
    %1107 = vmatprep.subr.mxu0 0.0
    %1108 = vmatpush1.msra.mxu0 0.0
    %1109 = vmatprep.subr.mxu0 0.0
    %1110 = vmatpush1.msra.mxu0 0.0
    %1111 = vmatprep.subr.mxu0 0.0
    %1112 = vmatpush1.msra.mxu0 0.0
    %1113 = vmatprep.mubr.f32.mxu0 0.0
    %1114 = vmatmul.mubr.f32.gmra.mrb[0].mxu0 %v1047
    %v1115 = vpop.f32.mrb[0].mxu0
    %v1116 = vadd.f32 0.0, %v1115
    %v1117 = vpop.f32.mrb[0].mxu0
    %1118 = vdwg.mxu0
    %1119 = vrot.lane.b32.xlu0 %v203, 48
    %v1120 = vpop.permute.xlu0 %1119
    %v1123 = vsel %vm209, %v1042, 0
    %1125 = vmatprep.subr.mxu0 0.0
    %1126 = vmatpush1.msra.mxu0 %v1120
    %1127 = vmatprep.subr.mxu0 0.0
    %1128 = vmatpush1.msra.mxu0 0.0
    %1129 = vmatprep.subr.mxu0 0.0
    %1130 = vmatpush1.msra.mxu0 0.0
    %1131 = vmatprep.subr.mxu0 0.0
    %1132 = vmatpush1.msra.mxu0 0.0
    %1133 = vmatprep.subr.mxu0 0.0
    %1134 = vmatpush1.msra.mxu0 0.0
    %1135 = vmatprep.subr.mxu0 0.0
    %1136 = vmatpush1.msra.mxu0 0.0
    %1137 = vmatprep.subr.mxu0 0.0
    %1138 = vmatpush1.msra.mxu0 0.0
    %1139 = vmatprep.subr.mxu0 0.0
    %1140 = vmatpush1.msra.mxu0 0.0
    %1141 = vmatprep.subr.mxu0 0.0
    %1142 = vmatpush1.msra.mxu0 0.0
    %1143 = vmatprep.subr.mxu0 0.0
    %1144 = vmatpush1.msra.mxu0 0.0
    %1145 = vmatprep.subr.mxu0 0.0
    %1146 = vmatpush1.msra.mxu0 0.0
    %1147 = vmatprep.subr.mxu0 0.0
    %1148 = vmatpush1.msra.mxu0 0.0
    %1149 = vmatprep.subr.mxu0 0.0
    %1150 = vmatpush1.msra.mxu0 0.0
    %1151 = vmatprep.subr.mxu0 0.0
    %1152 = vmatpush1.msra.mxu0 0.0
    %1153 = vmatprep.subr.mxu0 0.0
    %1154 = vmatpush1.msra.mxu0 0.0
    %1155 = vmatprep.subr.mxu0 0.0
    %1156 = vmatpush1.msra.mxu0 0.0
    %1157 = vmatprep.subr.mxu0 0.0
    %1158 = vmatpush1.msra.mxu0 0.0
    %1159 = vmatprep.subr.mxu0 0.0
    %1160 = vmatpush1.msra.mxu0 0.0
    %1161 = vmatprep.subr.mxu0 0.0
    %1162 = vmatpush1.msra.mxu0 0.0
    %1163 = vmatprep.subr.mxu0 0.0
    %1164 = vmatpush1.msra.mxu0 0.0
    %1165 = vmatprep.subr.mxu0 0.0
    %1166 = vmatpush1.msra.mxu0 0.0
    %1167 = vmatprep.subr.mxu0 0.0
    %1168 = vmatpush1.msra.mxu0 0.0
    %1169 = vmatprep.subr.mxu0 0.0
    %1170 = vmatpush1.msra.mxu0 0.0
    %1171 = vmatprep.subr.mxu0 0.0
    %1172 = vmatpush1.msra.mxu0 0.0
    %1173 = vmatprep.subr.mxu0 0.0
    %1174 = vmatpush1.msra.mxu0 0.0
    %1175 = vmatprep.subr.mxu0 0.0
    %1176 = vmatpush1.msra.mxu0 0.0
    %1177 = vmatprep.subr.mxu0 0.0
    %1178 = vmatpush1.msra.mxu0 0.0
    %1179 = vmatprep.subr.mxu0 0.0
    %1180 = vmatpush1.msra.mxu0 0.0
    %1181 = vmatprep.subr.mxu0 0.0
    %1182 = vmatpush1.msra.mxu0 0.0
    %1183 = vmatprep.subr.mxu0 0.0
    %1184 = vmatpush1.msra.mxu0 0.0
    %1185 = vmatprep.subr.mxu0 0.0
    %1186 = vmatpush1.msra.mxu0 0.0
    %1187 = vmatprep.subr.mxu0 0.0
    %1188 = vmatpush1.msra.mxu0 0.0
    %1189 = vmatprep.mubr.f32.mxu0 0.0
    %1190 = vmatmul.mubr.f32.gmra.mrb[0].mxu0 %v1123
    %v1191 = vpop.f32.mrb[0].mxu0
    %v1192 = vadd.f32 0.0, %v1191
    %v1193 = vpop.f32.mrb[0].mxu0
    %1194 = vdwg.mxu0
    %1195 = vrot.lane.b32.xlu0 %v198, 104
    %v1196 = vpop.permute.xlu0 %1195
    %1197 = vrot.lane.b32.xlu0 %v198, 72
    %v1198 = vpop.permute.xlu0 %1197
    %v1199 = vsel %vm209, %v1196, 0
    %v1201 = vsel %vm209, %v1198, 0
    %1203 = vmatprep.subr.mxu0 0.0
    %1204 = vmatpush1.xpose.msra.mxu0 %v1201
    %1205 = vmatprep.subr.mxu0 0.0
    %1206 = vmatpush1.xpose.msra.mxu0 0.0
    %1207 = vmatprep.subr.mxu0 0.0
    %1208 = vmatpush1.xpose.msra.mxu0 0.0
    %1209 = vmatprep.subr.mxu0 0.0
    %1210 = vmatpush1.xpose.msra.mxu0 0.0
    %1211 = vmatprep.subr.mxu0 0.0
    %1212 = vmatpush1.xpose.msra.mxu0 0.0
    %1213 = vmatprep.subr.mxu0 0.0
    %1214 = vmatpush1.xpose.msra.mxu0 0.0
    %1215 = vmatprep.subr.mxu0 0.0
    %1216 = vmatpush1.xpose.msra.mxu0 0.0
    %1217 = vmatprep.subr.mxu0 0.0
    %1218 = vmatpush1.xpose.msra.mxu0 0.0
    %1219 = vmatprep.subr.mxu0 0.0
    %1220 = vmatpush1.xpose.msra.mxu0 0.0
    %1221 = vmatprep.subr.mxu0 0.0
    %1222 = vmatpush1.xpose.msra.mxu0 0.0
    %1223 = vmatprep.subr.mxu0 0.0
    %1224 = vmatpush1.xpose.msra.mxu0 0.0
    %1225 = vmatprep.subr.mxu0 0.0
    %1226 = vmatpush1.xpose.msra.mxu0 0.0
    %1227 = vmatprep.subr.mxu0 0.0
    %1228 = vmatpush1.xpose.msra.mxu0 0.0
    %1229 = vmatprep.subr.mxu0 0.0
    %1230 = vmatpush1.xpose.msra.mxu0 0.0
    %1231 = vmatprep.subr.mxu0 0.0
    %1232 = vmatpush1.xpose.msra.mxu0 0.0
    %1233 = vmatprep.subr.mxu0 0.0
    %1234 = vmatpush1.xpose.msra.mxu0 0.0
    %1235 = vmatprep.subr.mxu0 0.0
    %1236 = vmatpush1.xpose.msra.mxu0 0.0
    %1237 = vmatprep.subr.mxu0 0.0
    %1238 = vmatpush1.xpose.msra.mxu0 0.0
    %1239 = vmatprep.subr.mxu0 0.0
    %1240 = vmatpush1.xpose.msra.mxu0 0.0
    %1241 = vmatprep.subr.mxu0 0.0
    %1242 = vmatpush1.xpose.msra.mxu0 0.0
    %1243 = vmatprep.subr.mxu0 0.0
    %1244 = vmatpush1.xpose.msra.mxu0 0.0
    %1245 = vmatprep.subr.mxu0 0.0
    %1246 = vmatpush1.xpose.msra.mxu0 0.0
    %1247 = vmatprep.subr.mxu0 0.0
    %1248 = vmatpush1.xpose.msra.mxu0 0.0
    %1249 = vmatprep.subr.mxu0 0.0
    %1250 = vmatpush1.xpose.msra.mxu0 0.0
    %1251 = vmatprep.subr.mxu0 0.0
    %1252 = vmatpush1.xpose.msra.mxu0 0.0
    %1253 = vmatprep.subr.mxu0 0.0
    %1254 = vmatpush1.xpose.msra.mxu0 0.0
    %1255 = vmatprep.subr.mxu0 0.0
    %1256 = vmatpush1.xpose.msra.mxu0 0.0
    %1257 = vmatprep.subr.mxu0 0.0
    %1258 = vmatpush1.xpose.msra.mxu0 0.0
    %1259 = vmatprep.subr.mxu0 0.0
    %1260 = vmatpush1.xpose.msra.mxu0 0.0
    %1261 = vmatprep.subr.mxu0 0.0
    %1262 = vmatpush1.xpose.msra.mxu0 0.0
    %1263 = vmatprep.subr.mxu0 0.0
    %1264 = vmatpush1.xpose.msra.mxu0 0.0
    %1265 = vmatprep.subr.mxu0 0.0
    %1266 = vmatpush1.xpose.msra.mxu0 0.0
    %1267 = vmatprep.mubr.f32.mxu0 0.0
    %1268 = vmatmul.mubr.f32.gmra.mrb[0].mxu0 %v1199
    %v1269 = vpop.f32.mrb[0].mxu0
    %v1270 = vadd.f32 0.0, %v1269
    %v1271 = vpop.f32.mrb[0].mxu0
    %1272 = vdwg.mxu0
    %1273 = vrot.lane.b32.xlu0 %v203, 104
    %v1274 = vpop.permute.xlu0 %1273
    %1275 = vrot.lane.b32.xlu0 %v203, 72
    %v1276 = vpop.permute.xlu0 %1275
    %v1277 = vsel %vm209, %v1274, 0
    %v1279 = vsel %vm209, %v1276, 0
    %1281 = vmatprep.subr.mxu0 0.0
    %1282 = vmatpush1.xpose.msra.mxu0 %v1279
    %1283 = vmatprep.subr.mxu0 0.0
    %1284 = vmatpush1.xpose.msra.mxu0 0.0
    %1285 = vmatprep.subr.mxu0 0.0
    %1286 = vmatpush1.xpose.msra.mxu0 0.0
    %1287 = vmatprep.subr.mxu0 0.0
    %1288 = vmatpush1.xpose.msra.mxu0 0.0
    %1289 = vmatprep.subr.mxu0 0.0
    %1290 = vmatpush1.xpose.msra.mxu0 0.0
    %1291 = vmatprep.subr.mxu0 0.0
    %1292 = vmatpush1.xpose.msra.mxu0 0.0
    %1293 = vmatprep.subr.mxu0 0.0
    %1294 = vmatpush1.xpose.msra.mxu0 0.0
    %1295 = vmatprep.subr.mxu0 0.0
    %1296 = vmatpush1.xpose.msra.mxu0 0.0
    %1297 = vmatprep.subr.mxu0 0.0
    %1298 = vmatpush1.xpose.msra.mxu0 0.0
    %1299 = vmatprep.subr.mxu0 0.0
    %1300 = vmatpush1.xpose.msra.mxu0 0.0
    %1301 = vmatprep.subr.mxu0 0.0
    %1302 = vmatpush1.xpose.msra.mxu0 0.0
    %1303 = vmatprep.subr.mxu0 0.0
    %1304 = vmatpush1.xpose.msra.mxu0 0.0
    %1305 = vmatprep.subr.mxu0 0.0
    %1306 = vmatpush1.xpose.msra.mxu0 0.0
    %1307 = vmatprep.subr.mxu0 0.0
    %1308 = vmatpush1.xpose.msra.mxu0 0.0
    %1309 = vmatprep.subr.mxu0 0.0
    %1310 = vmatpush1.xpose.msra.mxu0 0.0
    %1311 = vmatprep.subr.mxu0 0.0
    %1312 = vmatpush1.xpose.msra.mxu0 0.0
    %1313 = vmatprep.subr.mxu0 0.0
    %1314 = vmatpush1.xpose.msra.mxu0 0.0
    %1315 = vmatprep.subr.mxu0 0.0
    %1316 = vmatpush1.xpose.msra.mxu0 0.0
    %1317 = vmatprep.subr.mxu0 0.0
    %1318 = vmatpush1.xpose.msra.mxu0 0.0
    %1319 = vmatprep.subr.mxu0 0.0
    %1320 = vmatpush1.xpose.msra.mxu0 0.0
    %1321 = vmatprep.subr.mxu0 0.0
    %1322 = vmatpush1.xpose.msra.mxu0 0.0
    %1323 = vmatprep.subr.mxu0 0.0
    %1324 = vmatpush1.xpose.msra.mxu0 0.0
    %1325 = vmatprep.subr.mxu0 0.0
    %1326 = vmatpush1.xpose.msra.mxu0 0.0
    %1327 = vmatprep.subr.mxu0 0.0
    %1328 = vmatpush1.xpose.msra.mxu0 0.0
    %1329 = vmatprep.subr.mxu0 0.0
    %1330 = vmatpush1.xpose.msra.mxu0 0.0
    %1331 = vmatprep.subr.mxu0 0.0
    %1332 = vmatpush1.xpose.msra.mxu0 0.0
    %1333 = vmatprep.subr.mxu0 0.0
    %1334 = vmatpush1.xpose.msra.mxu0 0.0
    %1335 = vmatprep.subr.mxu0 0.0
    %1336 = vmatpush1.xpose.msra.mxu0 0.0
    %1337 = vmatprep.subr.mxu0 0.0
    %1338 = vmatpush1.xpose.msra.mxu0 0.0
    %1339 = vmatprep.subr.mxu0 0.0
    %1340 = vmatpush1.xpose.msra.mxu0 0.0
    %1341 = vmatprep.subr.mxu0 0.0
    %1342 = vmatpush1.xpose.msra.mxu0 0.0
    %1343 = vmatprep.subr.mxu0 0.0
    %1344 = vmatpush1.xpose.msra.mxu0 0.0
    %1345 = vmatprep.mubr.f32.mxu0 0.0
    %1346 = vmatmul.mubr.f32.gmra.mrb[0].mxu0 %v1277
    %v1347 = vpop.f32.mrb[0].mxu0
    %v1348 = vadd.f32 0.0, %v1347
    %v1349 = vpop.f32.mrb[0].mxu0
    %1350 = vdwg.mxu0
    %v1351 = vsel %vm209, %v1270, -inf
    %1352 = vmax.xlane.f32.xlu0 %v1351
    %v1353 = vpop.xlane.xlu0 %1352
    %v1354 = vsel %vm209, %v1348, -inf
    %1355 = vmax.xlane.f32.xlu0 %v1354
    %v1356 = vpop.xlane.xlu0 %1355
    %v1357 = vsub.f32 %v1270, %v1353
    %v1358 = vsub.f32 %v1348, %v1356
    %v1359 = vmul.f32 %v1357, 1.442695
    %v1360 = vpow.pop %v1359
    %v1361 = vmul.f32 %v1358, 1.442695
    %v1362 = vpow.pop %v1361
    %v1363 = vsel %vm209, %v1360, 0.0
    %1364 = vadd.xlane.f32.xlu0 %v1363
    %v1365 = vpop.xlane.xlu0 %1364
    %v1366 = vsel %vm209, %v1362, 0.0
    %1367 = vadd.xlane.f32.xlu0 %v1366
    %v1368 = vpop.xlane.xlu0 %1367
    %v1369 = vrcp.pop %v1365
    %v1370 = vrcp.pop %v1368
    %v1371 = vmul.f32 %v1360, %v1369
    %v1372 = vmul.f32 %v1362, %v1370
    %1373 = vrot.lane.b32.xlu0 %v198, 40
    %v1374 = vpop.permute.xlu0 %1373
    %v1377 = vsel %vm209, %v1371, 0
    %1379 = vmatprep.subr.mxu0 0.0
    %1380 = vmatpush1.msra.mxu0 %v1374
    %1381 = vmatprep.subr.mxu0 0.0
    %1382 = vmatpush1.msra.mxu0 0.0
    %1383 = vmatprep.subr.mxu0 0.0
    %1384 = vmatpush1.msra.mxu0 0.0
    %1385 = vmatprep.subr.mxu0 0.0
    %1386 = vmatpush1.msra.mxu0 0.0
    %1387 = vmatprep.subr.mxu0 0.0
    %1388 = vmatpush1.msra.mxu0 0.0
    %1389 = vmatprep.subr.mxu0 0.0
    %1390 = vmatpush1.msra.mxu0 0.0
    %1391 = vmatprep.subr.mxu0 0.0
    %1392 = vmatpush1.msra.mxu0 0.0
    %1393 = vmatprep.subr.mxu0 0.0
    %1394 = vmatpush1.msra.mxu0 0.0
    %1395 = vmatprep.subr.mxu0 0.0
    %1396 = vmatpush1.msra.mxu0 0.0
    %1397 = vmatprep.subr.mxu0 0.0
    %1398 = vmatpush1.msra.mxu0 0.0
    %1399 = vmatprep.subr.mxu0 0.0
    %1400 = vmatpush1.msra.mxu0 0.0
    %1401 = vmatprep.subr.mxu0 0.0
    %1402 = vmatpush1.msra.mxu0 0.0
    %1403 = vmatprep.subr.mxu0 0.0
    %1404 = vmatpush1.msra.mxu0 0.0
    %1405 = vmatprep.subr.mxu0 0.0
    %1406 = vmatpush1.msra.mxu0 0.0
    %1407 = vmatprep.subr.mxu0 0.0
    %1408 = vmatpush1.msra.mxu0 0.0
    %1409 = vmatprep.subr.mxu0 0.0
    %1410 = vmatpush1.msra.mxu0 0.0
    %1411 = vmatprep.subr.mxu0 0.0
    %1412 = vmatpush1.msra.mxu0 0.0
    %1413 = vmatprep.subr.mxu0 0.0
    %1414 = vmatpush1.msra.mxu0 0.0
    %1415 = vmatprep.subr.mxu0 0.0
    %1416 = vmatpush1.msra.mxu0 0.0
    %1417 = vmatprep.subr.mxu0 0.0
    %1418 = vmatpush1.msra.mxu0 0.0
    %1419 = vmatprep.subr.mxu0 0.0
    %1420 = vmatpush1.msra.mxu0 0.0
    %1421 = vmatprep.subr.mxu0 0.0
    %1422 = vmatpush1.msra.mxu0 0.0
    %1423 = vmatprep.subr.mxu0 0.0
    %1424 = vmatpush1.msra.mxu0 0.0
    %1425 = vmatprep.subr.mxu0 0.0
    %1426 = vmatpush1.msra.mxu0 0.0
    %1427 = vmatprep.subr.mxu0 0.0
    %1428 = vmatpush1.msra.mxu0 0.0
    %1429 = vmatprep.subr.mxu0 0.0
    %1430 = vmatpush1.msra.mxu0 0.0
    %1431 = vmatprep.subr.mxu0 0.0
    %1432 = vmatpush1.msra.mxu0 0.0
    %1433 = vmatprep.subr.mxu0 0.0
    %1434 = vmatpush1.msra.mxu0 0.0
    %1435 = vmatprep.subr.mxu0 0.0
    %1436 = vmatpush1.msra.mxu0 0.0
    %1437 = vmatprep.subr.mxu0 0.0
    %1438 = vmatpush1.msra.mxu0 0.0
    %1439 = vmatprep.subr.mxu0 0.0
    %1440 = vmatpush1.msra.mxu0 0.0
    %1441 = vmatprep.subr.mxu0 0.0
    %1442 = vmatpush1.msra.mxu0 0.0
    %1443 = vmatprep.mubr.f32.mxu0 0.0
    %1444 = vmatmul.mubr.f32.gmra.mrb[0].mxu0 %v1377
    %v1445 = vpop.f32.mrb[0].mxu0
    %v1446 = vadd.f32 0.0, %v1445
    %v1447 = vpop.f32.mrb[0].mxu0
    %1448 = vdwg.mxu0
    %1449 = vrot.lane.b32.xlu0 %v203, 40
    %v1450 = vpop.permute.xlu0 %1449
    %v1453 = vsel %vm209, %v1372, 0
    %1455 = vmatprep.subr.mxu0 0.0
    %1456 = vmatpush1.msra.mxu0 %v1450
    %1457 = vmatprep.subr.mxu0 0.0
    %1458 = vmatpush1.msra.mxu0 0.0
    %1459 = vmatprep.subr.mxu0 0.0
    %1460 = vmatpush1.msra.mxu0 0.0
    %1461 = vmatprep.subr.mxu0 0.0
    %1462 = vmatpush1.msra.mxu0 0.0
    %1463 = vmatprep.subr.mxu0 0.0
    %1464 = vmatpush1.msra.mxu0 0.0
    %1465 = vmatprep.subr.mxu0 0.0
    %1466 = vmatpush1.msra.mxu0 0.0
    %1467 = vmatprep.subr.mxu0 0.0
    %1468 = vmatpush1.msra.mxu0 0.0
    %1469 = vmatprep.subr.mxu0 0.0
    %1470 = vmatpush1.msra.mxu0 0.0
    %1471 = vmatprep.subr.mxu0 0.0
    %1472 = vmatpush1.msra.mxu0 0.0
    %1473 = vmatprep.subr.mxu0 0.0
    %1474 = vmatpush1.msra.mxu0 0.0
    %1475 = vmatprep.subr.mxu0 0.0
    %1476 = vmatpush1.msra.mxu0 0.0
    %1477 = vmatprep.subr.mxu0 0.0
    %1478 = vmatpush1.msra.mxu0 0.0
    %1479 = vmatprep.subr.mxu0 0.0
    %1480 = vmatpush1.msra.mxu0 0.0
    %1481 = vmatprep.subr.mxu0 0.0
    %1482 = vmatpush1.msra.mxu0 0.0
    %1483 = vmatprep.subr.mxu0 0.0
    %1484 = vmatpush1.msra.mxu0 0.0
    %1485 = vmatprep.subr.mxu0 0.0
    %1486 = vmatpush1.msra.mxu0 0.0
    %1487 = vmatprep.subr.mxu0 0.0
    %1488 = vmatpush1.msra.mxu0 0.0
    %1489 = vmatprep.subr.mxu0 0.0
    %1490 = vmatpush1.msra.mxu0 0.0
    %1491 = vmatprep.subr.mxu0 0.0
    %1492 = vmatpush1.msra.mxu0 0.0
    %1493 = vmatprep.subr.mxu0 0.0
    %1494 = vmatpush1.msra.mxu0 0.0
    %1495 = vmatprep.subr.mxu0 0.0
    %1496 = vmatpush1.msra.mxu0 0.0
    %1497 = vmatprep.subr.mxu0 0.0
    %1498 = vmatpush1.msra.mxu0 0.0
    %1499 = vmatprep.subr.mxu0 0.0
    %1500 = vmatpush1.msra.mxu0 0.0
    %1501 = vmatprep.subr.mxu0 0.0
    %1502 = vmatpush1.msra.mxu0 0.0
    %1503 = vmatprep.subr.mxu0 0.0
    %1504 = vmatpush1.msra.mxu0 0.0
    %1505 = vmatprep.subr.mxu0 0.0
    %1506 = vmatpush1.msra.mxu0 0.0
    %1507 = vmatprep.subr.mxu0 0.0
    %1508 = vmatpush1.msra.mxu0 0.0
    %1509 = vmatprep.subr.mxu0 0.0
    %1510 = vmatpush1.msra.mxu0 0.0
    %1511 = vmatprep.subr.mxu0 0.0
    %1512 = vmatpush1.msra.mxu0 0.0
    %1513 = vmatprep.subr.mxu0 0.0
    %1514 = vmatpush1.msra.mxu0 0.0
    %1515 = vmatprep.subr.mxu0 0.0
    %1516 = vmatpush1.msra.mxu0 0.0
    %1517 = vmatprep.subr.mxu0 0.0
    %1518 = vmatpush1.msra.mxu0 0.0
    %1519 = vmatprep.mubr.f32.mxu0 0.0
    %1520 = vmatmul.mubr.f32.gmra.mrb[0].mxu0 %v1453
    %v1521 = vpop.f32.mrb[0].mxu0
    %v1522 = vadd.f32 0.0, %v1521
    %v1523 = vpop.f32.mrb[0].mxu0
    %1524 = vdwg.mxu0
    %1527 = vrot.lane.b32.xlu0 %v786, 8
    %v1528 = vpop.permute.xlu0 %1527
    %1529 = vrot.lane.b32.xlu0 %v862, 8
    %v1530 = vpop.permute.xlu0 %1529
    %1535 = vrot.lane.b32.xlu0 %v1116, 16
    %v1536 = vpop.permute.xlu0 %1535
    %1537 = vrot.lane.b32.xlu0 %v1192, 16
    %v1538 = vpop.permute.xlu0 %1537
    %1543 = vrot.lane.b32.xlu0 %v1446, 24
    %v1544 = vpop.permute.xlu0 %1543
    %1545 = vrot.lane.b32.xlu0 %v1522, 24
    %v1546 = vpop.permute.xlu0 %1545
    %v1549 = vsel %vm209, %v456, %v1528
    %v1550 = vsel %vm209, %v532, %v1530
    %vm1551 = vcmask 130048
    %v1552 = vsel %vm1551, %v1549, %v1536
    %v1553 = vsel %vm1551, %v1550, %v1538
    %vm1554 = vcmask 195584
    %v1555 = vsel %vm1554, %v1552, %v1544
    %v1556 = vsel %vm1554, %v1553, %v1546
    %v1557 = vlaneseq
    %v1558 = vshrl.u32 %v1557, 7
    %v1559 = vsub.s32 0, %v1558
    %v1560 = vrot.slane %v59, %v1559
    %1565 = vrot.lane.b32.xlu0 %v42, 32
    %v1566 = vpop.permute.xlu0 %1565
    %1567 = vrot.lane.b32.xlu0 %v43, 32
    %v1568 = vpop.permute.xlu0 %1567
    %1569 = vrot.lane.b32.xlu0 %v44, 32
    %v1570 = vpop.permute.xlu0 %1569
    %1571 = vrot.lane.b32.xlu0 %v45, 32
    %v1572 = vpop.permute.xlu0 %1571
    %v1578 = vsel %vm66, %v1555, 0
    %v1581 = vsel %vm66, %v1556, 0
    %1583 = vmatprep.subr.mxu0 0.0
    %1584 = vmatpush1.msra.mxu0 %v1566
    %1585 = vmatprep.subr.mxu0 0.0
    %1586 = vmatpush1.msra.mxu0 %v1568
    %1587 = vmatprep.subr.mxu0 0.0
    %1588 = vmatpush1.msra.mxu0 %v1570
    %1589 = vmatprep.subr.mxu0 0.0
    %1590 = vmatpush1.msra.mxu0 %v1572
    %1591 = vmatprep.subr.mxu0 0.0
    %1592 = vmatpush1.msra.mxu0 0.0
    %1593 = vmatprep.subr.mxu0 0.0
    %1594 = vmatpush1.msra.mxu0 0.0
    %1595 = vmatprep.subr.mxu0 0.0
    %1596 = vmatpush1.msra.mxu0 0.0
    %1597 = vmatprep.subr.mxu0 0.0
    %1598 = vmatpush1.msra.mxu0 0.0
    %1599 = vmatprep.subr.mxu0 0.0
    %1600 = vmatpush1.msra.mxu0 0.0
    %1601 = vmatprep.subr.mxu0 0.0
    %1602 = vmatpush1.msra.mxu0 0.0
    %1603 = vmatprep.subr.mxu0 0.0
    %1604 = vmatpush1.msra.mxu0 0.0
    %1605 = vmatprep.subr.mxu0 0.0
    %1606 = vmatpush1.msra.mxu0 0.0
    %1607 = vmatprep.subr.mxu0 0.0
    %1608 = vmatpush1.msra.mxu0 0.0
    %1609 = vmatprep.subr.mxu0 0.0
    %1610 = vmatpush1.msra.mxu0 0.0
    %1611 = vmatprep.subr.mxu0 0.0
    %1612 = vmatpush1.msra.mxu0 0.0
    %1613 = vmatprep.subr.mxu0 0.0
    %1614 = vmatpush1.msra.mxu0 0.0
    %1615 = vmatprep.subr.mxu0 0.0
    %1616 = vmatpush1.msra.mxu0 0.0
    %1617 = vmatprep.subr.mxu0 0.0
    %1618 = vmatpush1.msra.mxu0 0.0
    %1619 = vmatprep.subr.mxu0 0.0
    %1620 = vmatpush1.msra.mxu0 0.0
    %1621 = vmatprep.subr.mxu0 0.0
    %1622 = vmatpush1.msra.mxu0 0.0
    %1623 = vmatprep.subr.mxu0 0.0
    %1624 = vmatpush1.msra.mxu0 0.0
    %1625 = vmatprep.subr.mxu0 0.0
    %1626 = vmatpush1.msra.mxu0 0.0
    %1627 = vmatprep.subr.mxu0 0.0
    %1628 = vmatpush1.msra.mxu0 0.0
    %1629 = vmatprep.subr.mxu0 0.0
    %1630 = vmatpush1.msra.mxu0 0.0
    %1631 = vmatprep.subr.mxu0 0.0
    %1632 = vmatpush1.msra.mxu0 0.0
    %1633 = vmatprep.subr.mxu0 0.0
    %1634 = vmatpush1.msra.mxu0 0.0
    %1635 = vmatprep.subr.mxu0 0.0
    %1636 = vmatpush1.msra.mxu0 0.0
    %1637 = vmatprep.subr.mxu0 0.0
    %1638 = vmatpush1.msra.mxu0 0.0
    %1639 = vmatprep.subr.mxu0 0.0
    %1640 = vmatpush1.msra.mxu0 0.0
    %1641 = vmatprep.subr.mxu0 0.0
    %1642 = vmatpush1.msra.mxu0 0.0
    %1643 = vmatprep.subr.mxu0 0.0
    %1644 = vmatpush1.msra.mxu0 0.0
    %1645 = vmatprep.subr.mxu0 0.0
    %1646 = vmatpush1.msra.mxu0 0.0
    %1647 = vmatprep.mubr.f32.mxu0 0.0
    %1648 = vmatmul.mubr.f32.gmra.mrb[0].mxu0 %v1578
    %v1649 = vpop.f32.mrb[0].mxu0
    %v1650 = vadd.f32 %v1560, %v1649
    %v1651 = vpop.f32.mrb[0].mxu0
    %1652 = vmatprep.mubr.f32.mxu0 0.0
    %1653 = vmatmul.mubr.f32.gmra.mrb[0].mxu0 %v1581
    %v1654 = vpop.f32.mrb[0].mxu0
    %v1655 = vadd.f32 %v1560, %v1654
    %v1656 = vpop.f32.mrb[0].mxu0
    %1657 = vdwg.mxu0
    %v1658 = vadd.f32 %v40, %v1650
    %v1659 = vadd.f32 %v41, %v1655
    %v1660 = vsel %vm66, %v1658, 0.0
    %1661 = vadd.xlane.f32.xlu0 %v1660
    %v1662 = vpop.xlane.xlu0 %1661
    %v1663 = vsel %vm66, %v1659, 0.0
    %1664 = vadd.xlane.f32.xlu0 %v1663
    %v1665 = vpop.xlane.xlu0 %1664
    %v1666 = vmul.f32 %v1662, %v73
    %v1667 = vmul.f32 %v1665, %v73
    %v1668 = vsub.f32 %v1658, %v1666
    %v1669 = vsub.f32 %v1659, %v1667
    %v1670 = vmul.f32 %v1668, %v1668
    %v1671 = vmul.f32 %v1669, %v1669
    %v1672 = vsel %vm66, %v1670, 0.0
    %1673 = vadd.xlane.f32.xlu0 %v1672
    %v1674 = vpop.xlane.xlu0 %1673
    %v1675 = vsel %vm66, %v1671, 0.0
    %1676 = vadd.xlane.f32.xlu0 %v1675
    %v1677 = vpop.xlane.xlu0 %1676
    %v1678 = vmul.f32 %v1674, %v86
    %v1679 = vmul.f32 %v1677, %v86
    %v1680 = vrsqrt.pop %v1678
    %v1681 = vmul.f32 %v1678, %v1680
    %vm1682 = vcmp.eq.f32.partialorder %v1678, inf
    %v1683 = vsel %vm1682, %v1678, %v1681
    %vm1684 = vcmp.eq.f32.partialorder %v1678, 0.0
    %v1685 = vand.u32 %v1678, 2147483648
    %v1686 = vsel %vm1684, %v1685, %v1683
    %v1687 = vrsqrt.pop %v1679
    %v1688 = vmul.f32 %v1679, %v1687
    %vm1689 = vcmp.eq.f32.partialorder %v1679, inf
    %v1690 = vsel %vm1689, %v1679, %v1688
    %vm1691 = vcmp.eq.f32.partialorder %v1679, 0.0
    %v1692 = vand.u32 %v1679, 2147483648
    %v1693 = vsel %vm1691, %v1692, %v1690
    %v1694 = vlaneseq
    %v1695 = vshrl.u32 %v1694, 7
    %v1696 = vsub.s32 0, %v1695
    %v1697 = vrot.slane %v64, %v1696
    %v1698 = vmul.f32 %v1697, %v1668
    %v1699 = vmul.f32 %v1697, %v1669
    %v1700 = vadd.f32 %v1686, 1e-06
    %v1701 = vadd.f32 %v1693, 1e-06
    %v1702 = vrcp.pop %v1700
    %v1703 = vrcp.pop %v1701
    %v1704 = vmul.f32 %v1698, %v1702
    %v1705 = vmul.f32 %v1699, %v1703
    %v1706 = vlaneseq
    %v1707 = vshrl.u32 %v1706, 7
    %v1708 = vsub.s32 0, %v1707
    %v1709 = vrot.slane %v65, %v1708
    %v1710 = vadd.f32 %v1704, %v1709
    %v1711 = vadd.f32 %v1705, %v1709
    %v1712 = vlaneseq
    %v1713 = vshrl.u32 %v1712, 7
    %v1714 = vsub.s32 0, %v1713
    %v1715 = vrot.slane %v60, %v1714
    %v1717 = vsel %vm66, %v1710, 0
    %v1720 = vsel %vm66, %v1711, 0
    %1722 = vmatprep.subr.mxu0 0.0
    %1723 = vmatpush1.msra.mxu0 %v46
    %1724 = vmatprep.subr.mxu0 0.0
    %1725 = vmatpush1.msra.mxu0 %v47
    %1726 = vmatprep.subr.mxu0 0.0
    %1727 = vmatpush1.msra.mxu0 %v48
    %1728 = vmatprep.subr.mxu0 0.0
    %1729 = vmatpush1.msra.mxu0 %v49
    %1730 = vmatprep.subr.mxu0 0.0
    %1731 = vmatpush1.msra.mxu0 0.0
    %1732 = vmatprep.subr.mxu0 0.0
    %1733 = vmatpush1.msra.mxu0 0.0
    %1734 = vmatprep.subr.mxu0 0.0
    %1735 = vmatpush1.msra.mxu0 0.0
    %1736 = vmatprep.subr.mxu0 0.0
    %1737 = vmatpush1.msra.mxu0 0.0
    %1738 = vmatprep.subr.mxu0 0.0
    %1739 = vmatpush1.msra.mxu0 0.0
    %1740 = vmatprep.subr.mxu0 0.0
    %1741 = vmatpush1.msra.mxu0 0.0
    %1742 = vmatprep.subr.mxu0 0.0
    %1743 = vmatpush1.msra.mxu0 0.0
    %1744 = vmatprep.subr.mxu0 0.0
    %1745 = vmatpush1.msra.mxu0 0.0
    %1746 = vmatprep.subr.mxu0 0.0
    %1747 = vmatpush1.msra.mxu0 0.0
    %1748 = vmatprep.subr.mxu0 0.0
    %1749 = vmatpush1.msra.mxu0 0.0
    %1750 = vmatprep.subr.mxu0 0.0
    %1751 = vmatpush1.msra.mxu0 0.0
    %1752 = vmatprep.subr.mxu0 0.0
    %1753 = vmatpush1.msra.mxu0 0.0
    %1754 = vmatprep.subr.mxu0 0.0
    %1755 = vmatpush1.msra.mxu0 0.0
    %1756 = vmatprep.subr.mxu0 0.0
    %1757 = vmatpush1.msra.mxu0 0.0
    %1758 = vmatprep.subr.mxu0 0.0
    %1759 = vmatpush1.msra.mxu0 0.0
    %1760 = vmatprep.subr.mxu0 0.0
    %1761 = vmatpush1.msra.mxu0 0.0
    %1762 = vmatprep.subr.mxu0 0.0
    %1763 = vmatpush1.msra.mxu0 0.0
    %1764 = vmatprep.subr.mxu0 0.0
    %1765 = vmatpush1.msra.mxu0 0.0
    %1766 = vmatprep.subr.mxu0 0.0
    %1767 = vmatpush1.msra.mxu0 0.0
    %1768 = vmatprep.subr.mxu0 0.0
    %1769 = vmatpush1.msra.mxu0 0.0
    %1770 = vmatprep.subr.mxu0 0.0
    %1771 = vmatpush1.msra.mxu0 0.0
    %1772 = vmatprep.subr.mxu0 0.0
    %1773 = vmatpush1.msra.mxu0 0.0
    %1774 = vmatprep.subr.mxu0 0.0
    %1775 = vmatpush1.msra.mxu0 0.0
    %1776 = vmatprep.subr.mxu0 0.0
    %1777 = vmatpush1.msra.mxu0 0.0
    %1778 = vmatprep.subr.mxu0 0.0
    %1779 = vmatpush1.msra.mxu0 0.0
    %1780 = vmatprep.subr.mxu0 0.0
    %1781 = vmatpush1.msra.mxu0 0.0
    %1782 = vmatprep.subr.mxu0 0.0
    %1783 = vmatpush1.msra.mxu0 0.0
    %1784 = vmatprep.subr.mxu0 0.0
    %1785 = vmatpush1.msra.mxu0 0.0
    %1786 = vmatprep.mubr.f32.mxu0 0.0
    %1787 = vmatmul.mubr.f32.gmra.mrb[0].mxu0 %v1717
    %v1788 = vpop.f32.mrb[0].mxu0
    %v1789 = vadd.f32 %v1715, %v1788
    %v1790 = vpop.f32.mrb[0].mxu0
    %1791 = vmatprep.mubr.f32.mxu0 0.0
    %1792 = vmatmul.mubr.f32.gmra.mrb[0].mxu0 %v1720
    %v1793 = vpop.f32.mrb[0].mxu0
    %v1794 = vadd.f32 %v1715, %v1793
    %v1795 = vpop.f32.mrb[0].mxu0
    %1796 = vdwg.mxu0
    %v1797 = vmax.f32 %v1789, 0.0
    %v1798 = vmax.f32 %v1794, 0.0
    %v1799 = vlaneseq
    %v1800 = vshrl.u32 %v1799, 7
    %v1801 = vsub.s32 0, %v1800
    %v1802 = vrot.slane %v61, %v1801
    %vm1803 = vcmask 523264
    %v1805 = vsel %vm1803, %v1797, 0
    %v1808 = vsel %vm1803, %v1798, 0
    %1810 = vmatprep.subr.mxu0 0.0
    %1811 = vmatpush1.msra.mxu0 %v50
    %1812 = vmatprep.subr.mxu0 0.0
    %1813 = vmatpush1.msra.mxu0 %v51
    %1814 = vmatprep.subr.mxu0 0.0
    %1815 = vmatpush1.msra.mxu0 %v52
    %1816 = vmatprep.subr.mxu0 0.0
    %1817 = vmatpush1.msra.mxu0 %v53
    %1818 = vmatprep.subr.mxu0 0.0
    %1819 = vmatpush1.msra.mxu0 %v54
    %1820 = vmatprep.subr.mxu0 0.0
    %1821 = vmatpush1.msra.mxu0 %v55
    %1822 = vmatprep.subr.mxu0 0.0
    %1823 = vmatpush1.msra.mxu0 %v56
    %1824 = vmatprep.subr.mxu0 0.0
    %1825 = vmatpush1.msra.mxu0 %v57
    %1826 = vmatprep.subr.mxu0 0.0
    %1827 = vmatpush1.msra.mxu0 0.0
    %1828 = vmatprep.subr.mxu0 0.0
    %1829 = vmatpush1.msra.mxu0 0.0
    %1830 = vmatprep.subr.mxu0 0.0
    %1831 = vmatpush1.msra.mxu0 0.0
    %1832 = vmatprep.subr.mxu0 0.0
    %1833 = vmatpush1.msra.mxu0 0.0
    %1834 = vmatprep.subr.mxu0 0.0
    %1835 = vmatpush1.msra.mxu0 0.0
    %1836 = vmatprep.subr.mxu0 0.0
    %1837 = vmatpush1.msra.mxu0 0.0
    %1838 = vmatprep.subr.mxu0 0.0
    %1839 = vmatpush1.msra.mxu0 0.0
    %1840 = vmatprep.subr.mxu0 0.0
    %1841 = vmatpush1.msra.mxu0 0.0
    %1842 = vmatprep.subr.mxu0 0.0
    %1843 = vmatpush1.msra.mxu0 0.0
    %1844 = vmatprep.subr.mxu0 0.0
    %1845 = vmatpush1.msra.mxu0 0.0
    %1846 = vmatprep.subr.mxu0 0.0
    %1847 = vmatpush1.msra.mxu0 0.0
    %1848 = vmatprep.subr.mxu0 0.0
    %1849 = vmatpush1.msra.mxu0 0.0
    %1850 = vmatprep.subr.mxu0 0.0
    %1851 = vmatpush1.msra.mxu0 0.0
    %1852 = vmatprep.subr.mxu0 0.0
    %1853 = vmatpush1.msra.mxu0 0.0
    %1854 = vmatprep.subr.mxu0 0.0
    %1855 = vmatpush1.msra.mxu0 0.0
    %1856 = vmatprep.subr.mxu0 0.0
    %1857 = vmatpush1.msra.mxu0 0.0
    %1858 = vmatprep.subr.mxu0 0.0
    %1859 = vmatpush1.msra.mxu0 0.0
    %1860 = vmatprep.subr.mxu0 0.0
    %1861 = vmatpush1.msra.mxu0 0.0
    %1862 = vmatprep.subr.mxu0 0.0
    %1863 = vmatpush1.msra.mxu0 0.0
    %1864 = vmatprep.subr.mxu0 0.0
    %1865 = vmatpush1.msra.mxu0 0.0
    %1866 = vmatprep.subr.mxu0 0.0
    %1867 = vmatpush1.msra.mxu0 0.0
    %1868 = vmatprep.subr.mxu0 0.0
    %1869 = vmatpush1.msra.mxu0 0.0
    %1870 = vmatprep.subr.mxu0 0.0
    %1871 = vmatpush1.msra.mxu0 0.0
    %1872 = vmatprep.subr.mxu0 0.0
    %1873 = vmatpush1.msra.mxu0 0.0
    %1874 = vmatprep.mubr.f32.mxu0 0.0
    %1875 = vmatmul.mubr.f32.gmra.mrb[0].mxu0 %v1805
    %v1876 = vpop.f32.mrb[0].mxu0
    %v1877 = vadd.f32 %v1802, %v1876
    %v1878 = vpop.f32.mrb[0].mxu0
    %1879 = vmatprep.mubr.f32.mxu0 0.0
    %1880 = vmatmul.mubr.f32.gmra.mrb[0].mxu0 %v1808
    %v1881 = vpop.f32.mrb[0].mxu0
    %v1882 = vadd.f32 %v1802, %v1881
    %v1883 = vpop.f32.mrb[0].mxu0
    %1884 = vdwg.mxu0
    %v1885 = vadd.f32 %v1658, %v1877
    %v1886 = vadd.f32 %v1659, %v1882
    %1887 = vst.msk [vmem:[#allocation7] sm:$0xff] %vm66, %v1885
    %1888 = vst.msk [vmem:[#allocation7 + $0x8] sm:$0xff] %vm66, %v1886
    // Predicated region
    $region18: #{tpu_custom_call.1} parent=1 // pred_check
      _
    $region19: #{tpu_custom_call.1} parent=1 // pred_check_branch
      %1890 = sbr.rel (0) target = $region21
    $region20: #{tpu_custom_call.1} parent=1 // pred_region
      %s1892 = ssub.s32 256, 256
      %1893 = vsyncadd [#allocation4], %s1892
      %s1894 = sshll.u32 [#allocation7], 4
      %s1895 = int_to_ptr.vmem [resolvable:$true] %s1894
      %1900 = dma.vmem_to_hbm [thread:$0]  %s1895, 256, %s2, [#allocation4], 128, 128, 8
    $region21: #{tpu_custom_call.1} parent=1 // pred_fallthru
      _
    // Predicated region
    $region22: #{tpu_custom_call.1} parent=1 // pred_check
      _
    $region23: #{tpu_custom_call.1} parent=1 // pred_check_branch
      %1902 = sbr.rel (0) target = $region25
    $region24: #{tpu_custom_call.1} parent=1 // pred_region
      %1903 = dma.done [#allocation4], 256
    $region25: #{tpu_custom_call.1} parent=1 // pred_fallthru
      _
    %1904 = vsyncpa [#allocation3], 1
    %1905 = vsyncpa [#allocation6], 1
    %1906 = vsyncpa [#allocation4], 1

</llo_original>
